<compile_context>
chip_gen: v7x
topology: tpu7x:2x2x1
jax: 0.10.0
libtpu: 0.0.40
codegen_flags: <defaults>
</compile_context>

<pallas_src>
import functools

import jax
import jax.numpy as jnp
import numpy as np
from jax.experimental import pallas as pl
from jax.experimental.pallas import tpu as pltpu


def resblock_kernel(x_ref, w1_ref, b1_ref, w2_ref, b2_ref, mask_ref,
                    out_ref, slab_ref, im_ref, *,
                    B_t, C, H, W, Wp, L, Ls, ext, offsets):
    """One grid step = B_t images.

    x_ref   : [B_t, C, H*W] f32   unpadded images (flattened spatial, NCHW)
    w1_ref  : [C, 9*C]      bf16  folded conv1 weights, column = t*C + cin
    b1_ref  : [C, 1]        f32
    w2_ref  : [C, 9*C]      bf16  folded conv2 weights
    b2_ref  : [C, 1]        f32
    mask_ref: [1, Ls]       f32   1.0 at interior pixels of the padded layout
    out_ref : [B_t, C, H*W] f32
    slab_ref: [C, Ls+2*ext] bf16  zero-padded activations (+ VMEM-only halo)
    im_ref  : [9*C, Ls]     bf16  im2col gather (9 shifted copies of the slab)
    """
    # ---- Build the zero-padded relu(x) slab in VMEM (jnp.pad fused here).
    # The memset runs every step (NOT behind pl.when): scratch is per-core and
    # the grid axis is "parallel", so every step must re-establish the zeros.
    slab_ref[...] = jnp.zeros(slab_ref.shape, slab_ref.dtype)
    for b in range(B_t):
        xb = jnp.maximum(x_ref[b], 0.0).astype(jnp.bfloat16)   # relu+cast once
        for i in range(H):
            dst = ext + b * L + (i + 1) * Wp + 1
            slab_ref[:, dst:dst + W] = xb[:, i * W:(i + 1) * W]

    def conv(w_ref):
        # Gather the 9 taps (static shifted lane slices) into the im2col
        # scratch, then a single K=9C matmul on the MXU with f32 accumulation.
        for t, off in enumerate(offsets):
            im_ref[t * C:(t + 1) * C, :] = slab_ref[:, off:off + Ls]
        return jnp.dot(w_ref[...], im_ref[...],
                       preferred_element_type=jnp.float32)

    # ---- conv1 + bias + relu; the resident mask zeroes the spatial-padding
    # lanes so conv2 sees proper zero padding; re-pad the slab in bf16
    # (halo lanes stay zero from the step-start memset).
    h1 = jnp.maximum(conv(w1_ref) + b1_ref[...], 0.0) * mask_ref[...]
    slab_ref[:, ext:ext + Ls] = h1.astype(jnp.bfloat16)

    # ---- conv2 + bias + residual; store only the H*W interior rows to the
    # unpadded output (crop fused here).
    y = conv(w2_ref) + b2_ref[...]
    for b in range(B_t):
        xb = x_ref[b]                                           # f32 residual
        for i in range(H):
            src = b * L + (i + 1) * Wp + 1
            out_ref[b, :, i * W:(i + 1) * W] = (
                y[:, src:src + W] + xb[:, i * W:(i + 1) * W])


def _largest_divisor_leq(n, k):
    for d in range(min(n, k), 0, -1):
        if n % d == 0:
            return d
    return 1


def residual_block(x, w1, b1, w2, b2, *, images_per_step=4):
    """x: [B, C, H, W] float32 (NCHW). Weights: [Cout, Cin, 3, 3]; biases: [C]."""
    B, C, H, W = x.shape
    Hp, Wp = H + 2, W + 2
    L = Hp * Wp                                   # padded pixels per image
    HW = H * W
    B_t = _largest_divisor_leq(B, images_per_step)   # images per grid step
    Ls = B_t * L                                  # lane width of slab interior
    ext = ((Wp + 1 + 127) // 128) * 128           # VMEM-only lane halo
    assert ext >= Wp + 1, "tap offsets would read outside the slab"
    Lse = Ls + 2 * ext

    # Wrapper glue is reshape-only (free): no pad, no crop, no transposes.
    x_flat = x.reshape(B, C, HW)

    # Fold the 9 taps into the contraction: [Cout, 9*Cin], column = t*C + cin,
    # t = ky*3 + kx (matches the im2col band order in the kernel).
    w1_m = jnp.transpose(w1, (0, 2, 3, 1)).reshape(C, 9 * C).astype(jnp.bfloat16)
    w2_m = jnp.transpose(w2, (0, 2, 3, 1)).reshape(C, 9 * C).astype(jnp.bfloat16)
    b1_r = b1.reshape(C, 1).astype(jnp.float32)
    b2_r = b2.reshape(C, 1).astype(jnp.float32)

    # Resident 0/1 interior mask over the concatenated padded images.
    m2d = jnp.zeros((Hp, Wp), jnp.float32).at[1:1 + H, 1:1 + W].set(1.0)
    mask = jnp.tile(m2d.reshape(1, L), (1, B_t))

    # Tap lane offsets relative to the slab origin (t = ky*3 + kx).
    offsets = tuple(ext + dy * Wp + dx for dy in (-1, 0, 1) for dx in (-1, 0, 1))

    kernel = functools.partial(resblock_kernel, B_t=B_t, C=C, H=H, W=W, Wp=Wp,
                               L=L, Ls=Ls, ext=ext, offsets=offsets)

    out_flat = pl.pallas_call(
        kernel,
        out_shape=jax.ShapeDtypeStruct((B, C, HW), jnp.float32),
        grid=(B // B_t,),
        in_specs=[
            pl.BlockSpec((B_t, C, HW), lambda g: (g, 0, 0)),   # x (B_t images)
            pl.BlockSpec((C, 9 * C), lambda g: (0, 0)),        # w1 (resident)
            pl.BlockSpec((C, 1), lambda g: (0, 0)),            # b1
            pl.BlockSpec((C, 9 * C), lambda g: (0, 0)),        # w2 (resident)
            pl.BlockSpec((C, 1), lambda g: (0, 0)),            # b2
            pl.BlockSpec((1, Ls), lambda g: (0, 0)),           # interior mask
        ],
        out_specs=pl.BlockSpec((B_t, C, HW), lambda g: (g, 0, 0)),
        scratch_shapes=[pltpu.VMEM((C, Lse), jnp.bfloat16),     # padded slab
                        pltpu.VMEM((9 * C, Ls), jnp.bfloat16)], # im2col
        compiler_params=pltpu.CompilerParams(
            # megacore on v7x whenever B // B_t >= 2; no-op on v5e/v6e.
            dimension_semantics=("parallel",),
            # Steady-state VMEM use here is well under 1 MiB/step; 32 MiB
            # leaves headroom on every generation (v7x physical is 64 MiB).
            vmem_limit_bytes=32 * 1024 * 1024),
    )(x_flat, w1_m, b1_r, w2_m, b2_r, mask)

    return out_flat.reshape(B, C, H, W)


def residual_block_ref(x, w1, b1, w2, b2):
    """Pure-JAX reference matching the PyTorch module."""
    def conv(h, w, b):
        y = jax.lax.conv_general_dilated(
            h, w, window_strides=(1, 1), padding=((1, 1), (1, 1)),
            dimension_numbers=('NCHW', 'OIHW', 'NCHW'))
        return y + b[None, :, None, None]
    h = jax.nn.relu(x)
    h = conv(h, w1, b1)
    h = jax.nn.relu(h)
    h = conv(h, w2, b2)
    return h + x


if __name__ == "__main__":
    B, C, H, W = 2, 4, 16, 16

    key = jax.random.PRNGKey(0)
    kx, kw1, kb1, kw2, kb2 = jax.random.split(key, 5)

    x = jax.random.normal(kx, (B, C, H, W), dtype=jnp.float32)
    # Deterministic synthetic parameters (Conv2d(C, C, 3, padding=1) shapes).
    w1 = 0.1 * jax.random.normal(kw1, (C, C, 3, 3), dtype=jnp.float32)
    b1 = 0.1 * jax.random.normal(kb1, (C,), dtype=jnp.float32)
    w2 = 0.1 * jax.random.normal(kw2, (C, C, 3, 3), dtype=jnp.float32)
    b2 = 0.1 * jax.random.normal(kb2, (C,), dtype=jnp.float32)

    out = jax.block_until_ready(jax.jit(residual_block)(x, w1, b1, w2, b2))
    ref = jax.block_until_ready(residual_block_ref(x, w1, b1, w2, b2))

    np.testing.assert_allclose(np.asarray(out), np.asarray(ref),
                               rtol=2e-2, atol=2e-2)
    print("KERNEL_OK")
</pallas_src>

<mosaic_0001>
module attributes {stable_mosaic.version = 11 : i64} {
  func.func @resblock_kernel(%arg0: i32, %arg1: memref<2x4x256xf32, #tpu.memory_space<vmem>>, %arg2: memref<4x36xbf16, #tpu.memory_space<vmem>>, %arg3: memref<4x1xf32, #tpu.memory_space<vmem>>, %arg4: memref<4x36xbf16, #tpu.memory_space<vmem>>, %arg5: memref<4x1xf32, #tpu.memory_space<vmem>>, %arg6: memref<1x648xf32, #tpu.memory_space<vmem>>, %arg7: memref<2x4x256xf32, #tpu.memory_space<vmem>>, %arg8: memref<4x904xbf16, #tpu.memory_space<vmem>>, %arg9: memref<36x648xbf16, #tpu.memory_space<vmem>>) attributes {dimension_semantics = [#tpu.dimension_semantics<parallel>], iteration_bounds = array<i64: 1>, scalar_prefetch = 0 : i64, scratch_operands = 2 : i64, tpu.core_type = #tpu.core_type<tc>, window_params = [{transform_indices = @transform_0, window_bounds = array<i64: 2, 4, 256>}, {pipeline_mode = #tpu.pipeline_mode<synchronous>, transform_indices = @transform_1, window_bounds = array<i64: 4, 36>}, {pipeline_mode = #tpu.pipeline_mode<synchronous>, transform_indices = @transform_2, window_bounds = array<i64: 4, 1>}, {pipeline_mode = #tpu.pipeline_mode<synchronous>, transform_indices = @transform_3, window_bounds = array<i64: 4, 36>}, {pipeline_mode = #tpu.pipeline_mode<synchronous>, transform_indices = @transform_4, window_bounds = array<i64: 4, 1>}, {pipeline_mode = #tpu.pipeline_mode<synchronous>, transform_indices = @transform_5, window_bounds = array<i64: 1, 648>}, {transform_indices = @transform_6, window_bounds = array<i64: 2, 4, 256>}]} {
    %cst = arith.constant 0.000000e+00 : bf16
    %0 = vector.broadcast %cst : bf16 to vector<4x904xbf16>
    %c0 = arith.constant 0 : index
    %c0_0 = arith.constant 0 : index
    %1 = vector.load %arg8[%c0, %c0_0] : memref<4x904xbf16, #tpu.memory_space<vmem>>, vector<4x904xbf16>
    tpu.vector_store %arg8[%c0, %c0_0], %0 {strides = array<i32>} : memref<4x904xbf16, #tpu.memory_space<vmem>>, vector<4x904xbf16>,
    %c0_1 = arith.constant 0 : index
    %c0_2 = arith.constant 0 : index
    %c0_3 = arith.constant 0 : index
    %2 = vector.load %arg1[%c0_1, %c0_2, %c0_3] : memref<2x4x256xf32, #tpu.memory_space<vmem>>, vector<1x4x256xf32>
    %3 = vector.shape_cast %2 : vector<1x4x256xf32> to vector<4x256xf32>
    %cst_4 = arith.constant 0.000000e+00 : f32
    %4 = vector.broadcast %cst_4 : f32 to vector<4x256xf32>
    %5 = arith.maximumf %3, %4 : vector<4x256xf32>
    %6 = arith.truncf %5 : vector<4x256xf32> to vector<4x256xbf16>
    %7 = vector.extract_strided_slice %6 {offsets = [0, 0], sizes = [4, 16], strides = [1, 1]} : vector<4x256xbf16> to vector<4x16xbf16>
    %c0_5 = arith.constant 0 : index
    %c147 = arith.constant 147 : index
    %8 = vector.load %arg8[%c0_5, %c147] : memref<4x904xbf16, #tpu.memory_space<vmem>>, vector<4x16xbf16>
    tpu.vector_store %arg8[%c0_5, %c147], %7 {strides = array<i32>} : memref<4x904xbf16, #tpu.memory_space<vmem>>, vector<4x16xbf16>,
    %9 = vector.extract_strided_slice %6 {offsets = [0, 16], sizes = [4, 16], strides = [1, 1]} : vector<4x256xbf16> to vector<4x16xbf16>
    %c0_6 = arith.constant 0 : index
    %c165 = arith.constant 165 : index
    %10 = vector.load %arg8[%c0_6, %c165] : memref<4x904xbf16, #tpu.memory_space<vmem>>, vector<4x16xbf16>
    tpu.vector_store %arg8[%c0_6, %c165], %9 {strides = array<i32>} : memref<4x904xbf16, #tpu.memory_space<vmem>>, vector<4x16xbf16>,
    %11 = vector.extract_strided_slice %6 {offsets = [0, 32], sizes = [4, 16], strides = [1, 1]} : vector<4x256xbf16> to vector<4x16xbf16>
    %c0_7 = arith.constant 0 : index
    %c183 = arith.constant 183 : index
    %12 = vector.load %arg8[%c0_7, %c183] : memref<4x904xbf16, #tpu.memory_space<vmem>>, vector<4x16xbf16>
    tpu.vector_store %arg8[%c0_7, %c183], %11 {strides = array<i32>} : memref<4x904xbf16, #tpu.memory_space<vmem>>, vector<4x16xbf16>,
    %13 = vector.extract_strided_slice %6 {offsets = [0, 48], sizes = [4, 16], strides = [1, 1]} : vector<4x256xbf16> to vector<4x16xbf16>
    %c0_8 = arith.constant 0 : index
    %c201 = arith.constant 201 : index
    %14 = vector.load %arg8[%c0_8, %c201] : memref<4x904xbf16, #tpu.memory_space<vmem>>, vector<4x16xbf16>
    tpu.vector_store %arg8[%c0_8, %c201], %13 {strides = array<i32>} : memref<4x904xbf16, #tpu.memory_space<vmem>>, vector<4x16xbf16>,
    %15 = vector.extract_strided_slice %6 {offsets = [0, 64], sizes = [4, 16], strides = [1, 1]} : vector<4x256xbf16> to vector<4x16xbf16>
    %c0_9 = arith.constant 0 : index
    %c219 = arith.constant 219 : index
    %16 = vector.load %arg8[%c0_9, %c219] : memref<4x904xbf16, #tpu.memory_space<vmem>>, vector<4x16xbf16>
    tpu.vector_store %arg8[%c0_9, %c219], %15 {strides = array<i32>} : memref<4x904xbf16, #tpu.memory_space<vmem>>, vector<4x16xbf16>,
    %17 = vector.extract_strided_slice %6 {offsets = [0, 80], sizes = [4, 16], strides = [1, 1]} : vector<4x256xbf16> to vector<4x16xbf16>
    %c0_10 = arith.constant 0 : index
    %c237 = arith.constant 237 : index
    %18 = vector.load %arg8[%c0_10, %c237] : memref<4x904xbf16, #tpu.memory_space<vmem>>, vector<4x16xbf16>
    tpu.vector_store %arg8[%c0_10, %c237], %17 {strides = array<i32>} : memref<4x904xbf16, #tpu.memory_space<vmem>>, vector<4x16xbf16>,
    %19 = vector.extract_strided_slice %6 {offsets = [0, 96], sizes = [4, 16], strides = [1, 1]} : vector<4x256xbf16> to vector<4x16xbf16>
    %c0_11 = arith.constant 0 : index
    %c255 = arith.constant 255 : index
    %20 = vector.load %arg8[%c0_11, %c255] : memref<4x904xbf16, #tpu.memory_space<vmem>>, vector<4x16xbf16>
    tpu.vector_store %arg8[%c0_11, %c255], %19 {strides = array<i32>} : memref<4x904xbf16, #tpu.memory_space<vmem>>, vector<4x16xbf16>,
    %21 = vector.extract_strided_slice %6 {offsets = [0, 112], sizes = [4, 16], strides = [1, 1]} : vector<4x256xbf16> to vector<4x16xbf16>
    %c0_12 = arith.constant 0 : index
    %c273 = arith.constant 273 : index
    %22 = vector.load %arg8[%c0_12, %c273] : memref<4x904xbf16, #tpu.memory_space<vmem>>, vector<4x16xbf16>
    tpu.vector_store %arg8[%c0_12, %c273], %21 {strides = array<i32>} : memref<4x904xbf16, #tpu.memory_space<vmem>>, vector<4x16xbf16>,
    %23 = vector.extract_strided_slice %6 {offsets = [0, 128], sizes = [4, 16], strides = [1, 1]} : vector<4x256xbf16> to vector<4x16xbf16>
    %c0_13 = arith.constant 0 : index
    %c291 = arith.constant 291 : index
    %24 = vector.load %arg8[%c0_13, %c291] : memref<4x904xbf16, #tpu.memory_space<vmem>>, vector<4x16xbf16>
    tpu.vector_store %arg8[%c0_13, %c291], %23 {strides = array<i32>} : memref<4x904xbf16, #tpu.memory_space<vmem>>, vector<4x16xbf16>,
    %25 = vector.extract_strided_slice %6 {offsets = [0, 144], sizes = [4, 16], strides = [1, 1]} : vector<4x256xbf16> to vector<4x16xbf16>
    %c0_14 = arith.constant 0 : index
    %c309 = arith.constant 309 : index
    %26 = vector.load %arg8[%c0_14, %c309] : memref<4x904xbf16, #tpu.memory_space<vmem>>, vector<4x16xbf16>
    tpu.vector_store %arg8[%c0_14, %c309], %25 {strides = array<i32>} : memref<4x904xbf16, #tpu.memory_space<vmem>>, vector<4x16xbf16>,
    %27 = vector.extract_strided_slice %6 {offsets = [0, 160], sizes = [4, 16], strides = [1, 1]} : vector<4x256xbf16> to vector<4x16xbf16>
    %c0_15 = arith.constant 0 : index
    %c327 = arith.constant 327 : index
    %28 = vector.load %arg8[%c0_15, %c327] : memref<4x904xbf16, #tpu.memory_space<vmem>>, vector<4x16xbf16>
    tpu.vector_store %arg8[%c0_15, %c327], %27 {strides = array<i32>} : memref<4x904xbf16, #tpu.memory_space<vmem>>, vector<4x16xbf16>,
    %29 = vector.extract_strided_slice %6 {offsets = [0, 176], sizes = [4, 16], strides = [1, 1]} : vector<4x256xbf16> to vector<4x16xbf16>
    %c0_16 = arith.constant 0 : index
    %c345 = arith.constant 345 : index
    %30 = vector.load %arg8[%c0_16, %c345] : memref<4x904xbf16, #tpu.memory_space<vmem>>, vector<4x16xbf16>
    tpu.vector_store %arg8[%c0_16, %c345], %29 {strides = array<i32>} : memref<4x904xbf16, #tpu.memory_space<vmem>>, vector<4x16xbf16>,
    %31 = vector.extract_strided_slice %6 {offsets = [0, 192], sizes = [4, 16], strides = [1, 1]} : vector<4x256xbf16> to vector<4x16xbf16>
    %c0_17 = arith.constant 0 : index
    %c363 = arith.constant 363 : index
    %32 = vector.load %arg8[%c0_17, %c363] : memref<4x904xbf16, #tpu.memory_space<vmem>>, vector<4x16xbf16>
    tpu.vector_store %arg8[%c0_17, %c363], %31 {strides = array<i32>} : memref<4x904xbf16, #tpu.memory_space<vmem>>, vector<4x16xbf16>,
    %33 = vector.extract_strided_slice %6 {offsets = [0, 208], sizes = [4, 16], strides = [1, 1]} : vector<4x256xbf16> to vector<4x16xbf16>
    %c0_18 = arith.constant 0 : index
    %c381 = arith.constant 381 : index
    %34 = vector.load %arg8[%c0_18, %c381] : memref<4x904xbf16, #tpu.memory_space<vmem>>, vector<4x16xbf16>
    tpu.vector_store %arg8[%c0_18, %c381], %33 {strides = array<i32>} : memref<4x904xbf16, #tpu.memory_space<vmem>>, vector<4x16xbf16>,
    %35 = vector.extract_strided_slice %6 {offsets = [0, 224], sizes = [4, 16], strides = [1, 1]} : vector<4x256xbf16> to vector<4x16xbf16>
    %c0_19 = arith.constant 0 : index
    %c399 = arith.constant 399 : index
    %36 = vector.load %arg8[%c0_19, %c399] : memref<4x904xbf16, #tpu.memory_space<vmem>>, vector<4x16xbf16>
    tpu.vector_store %arg8[%c0_19, %c399], %35 {strides = array<i32>} : memref<4x904xbf16, #tpu.memory_space<vmem>>, vector<4x16xbf16>,
    %37 = vector.extract_strided_slice %6 {offsets = [0, 240], sizes = [4, 16], strides = [1, 1]} : vector<4x256xbf16> to vector<4x16xbf16>
    %c0_20 = arith.constant 0 : index
    %c417 = arith.constant 417 : index
    %38 = vector.load %arg8[%c0_20, %c417] : memref<4x904xbf16, #tpu.memory_space<vmem>>, vector<4x16xbf16>
    tpu.vector_store %arg8[%c0_20, %c417], %37 {strides = array<i32>} : memref<4x904xbf16, #tpu.memory_space<vmem>>, vector<4x16xbf16>,
    %c1 = arith.constant 1 : index
    %c0_21 = arith.constant 0 : index
    %c0_22 = arith.constant 0 : index
    %39 = vector.load %arg1[%c1, %c0_21, %c0_22] : memref<2x4x256xf32, #tpu.memory_space<vmem>>, vector<1x4x256xf32>
    %40 = vector.shape_cast %39 : vector<1x4x256xf32> to vector<4x256xf32>
    %cst_23 = arith.constant 0.000000e+00 : f32
    %41 = vector.broadcast %cst_23 : f32 to vector<4x256xf32>
    %42 = arith.maximumf %40, %41 : vector<4x256xf32>
    %43 = arith.truncf %42 : vector<4x256xf32> to vector<4x256xbf16>
    %44 = vector.extract_strided_slice %43 {offsets = [0, 0], sizes = [4, 16], strides = [1, 1]} : vector<4x256xbf16> to vector<4x16xbf16>
    %c0_24 = arith.constant 0 : index
    %c471 = arith.constant 471 : index
    %45 = vector.load %arg8[%c0_24, %c471] : memref<4x904xbf16, #tpu.memory_space<vmem>>, vector<4x16xbf16>
    tpu.vector_store %arg8[%c0_24, %c471], %44 {strides = array<i32>} : memref<4x904xbf16, #tpu.memory_space<vmem>>, vector<4x16xbf16>,
    %46 = vector.extract_strided_slice %43 {offsets = [0, 16], sizes = [4, 16], strides = [1, 1]} : vector<4x256xbf16> to vector<4x16xbf16>
    %c0_25 = arith.constant 0 : index
    %c489 = arith.constant 489 : index
    %47 = vector.load %arg8[%c0_25, %c489] : memref<4x904xbf16, #tpu.memory_space<vmem>>, vector<4x16xbf16>
    tpu.vector_store %arg8[%c0_25, %c489], %46 {strides = array<i32>} : memref<4x904xbf16, #tpu.memory_space<vmem>>, vector<4x16xbf16>,
    %48 = vector.extract_strided_slice %43 {offsets = [0, 32], sizes = [4, 16], strides = [1, 1]} : vector<4x256xbf16> to vector<4x16xbf16>
    %c0_26 = arith.constant 0 : index
    %c507 = arith.constant 507 : index
    %49 = vector.load %arg8[%c0_26, %c507] : memref<4x904xbf16, #tpu.memory_space<vmem>>, vector<4x16xbf16>
    tpu.vector_store %arg8[%c0_26, %c507], %48 {strides = array<i32>} : memref<4x904xbf16, #tpu.memory_space<vmem>>, vector<4x16xbf16>,
    %50 = vector.extract_strided_slice %43 {offsets = [0, 48], sizes = [4, 16], strides = [1, 1]} : vector<4x256xbf16> to vector<4x16xbf16>
    %c0_27 = arith.constant 0 : index
    %c525 = arith.constant 525 : index
    %51 = vector.load %arg8[%c0_27, %c525] : memref<4x904xbf16, #tpu.memory_space<vmem>>, vector<4x16xbf16>
    tpu.vector_store %arg8[%c0_27, %c525], %50 {strides = array<i32>} : memref<4x904xbf16, #tpu.memory_space<vmem>>, vector<4x16xbf16>,
    %52 = vector.extract_strided_slice %43 {offsets = [0, 64], sizes = [4, 16], strides = [1, 1]} : vector<4x256xbf16> to vector<4x16xbf16>
    %c0_28 = arith.constant 0 : index
    %c543 = arith.constant 543 : index
    %53 = vector.load %arg8[%c0_28, %c543] : memref<4x904xbf16, #tpu.memory_space<vmem>>, vector<4x16xbf16>
    tpu.vector_store %arg8[%c0_28, %c543], %52 {strides = array<i32>} : memref<4x904xbf16, #tpu.memory_space<vmem>>, vector<4x16xbf16>,
    %54 = vector.extract_strided_slice %43 {offsets = [0, 80], sizes = [4, 16], strides = [1, 1]} : vector<4x256xbf16> to vector<4x16xbf16>
    %c0_29 = arith.constant 0 : index
    %c561 = arith.constant 561 : index
    %55 = vector.load %arg8[%c0_29, %c561] : memref<4x904xbf16, #tpu.memory_space<vmem>>, vector<4x16xbf16>
    tpu.vector_store %arg8[%c0_29, %c561], %54 {strides = array<i32>} : memref<4x904xbf16, #tpu.memory_space<vmem>>, vector<4x16xbf16>,
    %56 = vector.extract_strided_slice %43 {offsets = [0, 96], sizes = [4, 16], strides = [1, 1]} : vector<4x256xbf16> to vector<4x16xbf16>
    %c0_30 = arith.constant 0 : index
    %c579 = arith.constant 579 : index
    %57 = vector.load %arg8[%c0_30, %c579] : memref<4x904xbf16, #tpu.memory_space<vmem>>, vector<4x16xbf16>
    tpu.vector_store %arg8[%c0_30, %c579], %56 {strides = array<i32>} : memref<4x904xbf16, #tpu.memory_space<vmem>>, vector<4x16xbf16>,
    %58 = vector.extract_strided_slice %43 {offsets = [0, 112], sizes = [4, 16], strides = [1, 1]} : vector<4x256xbf16> to vector<4x16xbf16>
    %c0_31 = arith.constant 0 : index
    %c597 = arith.constant 597 : index
    %59 = vector.load %arg8[%c0_31, %c597] : memref<4x904xbf16, #tpu.memory_space<vmem>>, vector<4x16xbf16>
    tpu.vector_store %arg8[%c0_31, %c597], %58 {strides = array<i32>} : memref<4x904xbf16, #tpu.memory_space<vmem>>, vector<4x16xbf16>,
    %60 = vector.extract_strided_slice %43 {offsets = [0, 128], sizes = [4, 16], strides = [1, 1]} : vector<4x256xbf16> to vector<4x16xbf16>
    %c0_32 = arith.constant 0 : index
    %c615 = arith.constant 615 : index
    %61 = vector.load %arg8[%c0_32, %c615] : memref<4x904xbf16, #tpu.memory_space<vmem>>, vector<4x16xbf16>
    tpu.vector_store %arg8[%c0_32, %c615], %60 {strides = array<i32>} : memref<4x904xbf16, #tpu.memory_space<vmem>>, vector<4x16xbf16>,
    %62 = vector.extract_strided_slice %43 {offsets = [0, 144], sizes = [4, 16], strides = [1, 1]} : vector<4x256xbf16> to vector<4x16xbf16>
    %c0_33 = arith.constant 0 : index
    %c633 = arith.constant 633 : index
    %63 = vector.load %arg8[%c0_33, %c633] : memref<4x904xbf16, #tpu.memory_space<vmem>>, vector<4x16xbf16>
    tpu.vector_store %arg8[%c0_33, %c633], %62 {strides = array<i32>} : memref<4x904xbf16, #tpu.memory_space<vmem>>, vector<4x16xbf16>,
    %64 = vector.extract_strided_slice %43 {offsets = [0, 160], sizes = [4, 16], strides = [1, 1]} : vector<4x256xbf16> to vector<4x16xbf16>
    %c0_34 = arith.constant 0 : index
    %c651 = arith.constant 651 : index
    %65 = vector.load %arg8[%c0_34, %c651] : memref<4x904xbf16, #tpu.memory_space<vmem>>, vector<4x16xbf16>
    tpu.vector_store %arg8[%c0_34, %c651], %64 {strides = array<i32>} : memref<4x904xbf16, #tpu.memory_space<vmem>>, vector<4x16xbf16>,
    %66 = vector.extract_strided_slice %43 {offsets = [0, 176], sizes = [4, 16], strides = [1, 1]} : vector<4x256xbf16> to vector<4x16xbf16>
    %c0_35 = arith.constant 0 : index
    %c669 = arith.constant 669 : index
    %67 = vector.load %arg8[%c0_35, %c669] : memref<4x904xbf16, #tpu.memory_space<vmem>>, vector<4x16xbf16>
    tpu.vector_store %arg8[%c0_35, %c669], %66 {strides = array<i32>} : memref<4x904xbf16, #tpu.memory_space<vmem>>, vector<4x16xbf16>,
    %68 = vector.extract_strided_slice %43 {offsets = [0, 192], sizes = [4, 16], strides = [1, 1]} : vector<4x256xbf16> to vector<4x16xbf16>
    %c0_36 = arith.constant 0 : index
    %c687 = arith.constant 687 : index
    %69 = vector.load %arg8[%c0_36, %c687] : memref<4x904xbf16, #tpu.memory_space<vmem>>, vector<4x16xbf16>
    tpu.vector_store %arg8[%c0_36, %c687], %68 {strides = array<i32>} : memref<4x904xbf16, #tpu.memory_space<vmem>>, vector<4x16xbf16>,
    %70 = vector.extract_strided_slice %43 {offsets = [0, 208], sizes = [4, 16], strides = [1, 1]} : vector<4x256xbf16> to vector<4x16xbf16>
    %c0_37 = arith.constant 0 : index
    %c705 = arith.constant 705 : index
    %71 = vector.load %arg8[%c0_37, %c705] : memref<4x904xbf16, #tpu.memory_space<vmem>>, vector<4x16xbf16>
    tpu.vector_store %arg8[%c0_37, %c705], %70 {strides = array<i32>} : memref<4x904xbf16, #tpu.memory_space<vmem>>, vector<4x16xbf16>,
    %72 = vector.extract_strided_slice %43 {offsets = [0, 224], sizes = [4, 16], strides = [1, 1]} : vector<4x256xbf16> to vector<4x16xbf16>
    %c0_38 = arith.constant 0 : index
    %c723 = arith.constant 723 : index
    %73 = vector.load %arg8[%c0_38, %c723] : memref<4x904xbf16, #tpu.memory_space<vmem>>, vector<4x16xbf16>
    tpu.vector_store %arg8[%c0_38, %c723], %72 {strides = array<i32>} : memref<4x904xbf16, #tpu.memory_space<vmem>>, vector<4x16xbf16>,
    %74 = vector.extract_strided_slice %43 {offsets = [0, 240], sizes = [4, 16], strides = [1, 1]} : vector<4x256xbf16> to vector<4x16xbf16>
    %c0_39 = arith.constant 0 : index
    %c741 = arith.constant 741 : index
    %75 = vector.load %arg8[%c0_39, %c741] : memref<4x904xbf16, #tpu.memory_space<vmem>>, vector<4x16xbf16>
    tpu.vector_store %arg8[%c0_39, %c741], %74 {strides = array<i32>} : memref<4x904xbf16, #tpu.memory_space<vmem>>, vector<4x16xbf16>,
    %c0_40 = arith.constant 0 : index
    %c109 = arith.constant 109 : index
    %76 = vector.load %arg8[%c0_40, %c109] : memref<4x904xbf16, #tpu.memory_space<vmem>>, vector<4x648xbf16>
    %c0_41 = arith.constant 0 : index
    %c0_42 = arith.constant 0 : index
    %77 = vector.load %arg9[%c0_41, %c0_42] : memref<36x648xbf16, #tpu.memory_space<vmem>>, vector<4x648xbf16>
    tpu.vector_store %arg9[%c0_41, %c0_42], %76 {strides = array<i32>} : memref<36x648xbf16, #tpu.memory_space<vmem>>, vector<4x648xbf16>,
    %c0_43 = arith.constant 0 : index
    %c110 = arith.constant 110 : index
    %78 = vector.load %arg8[%c0_43, %c110] : memref<4x904xbf16, #tpu.memory_space<vmem>>, vector<4x648xbf16>
    %c4 = arith.constant 4 : index
    %c0_44 = arith.constant 0 : index
    %79 = vector.load %arg9[%c4, %c0_44] : memref<36x648xbf16, #tpu.memory_space<vmem>>, vector<4x648xbf16>
    tpu.vector_store %arg9[%c4, %c0_44], %78 {strides = array<i32>} : memref<36x648xbf16, #tpu.memory_space<vmem>>, vector<4x648xbf16>,
    %c0_45 = arith.constant 0 : index
    %c111 = arith.constant 111 : index
    %80 = vector.load %arg8[%c0_45, %c111] : memref<4x904xbf16, #tpu.memory_space<vmem>>, vector<4x648xbf16>
    %c8 = arith.constant 8 : index
    %c0_46 = arith.constant 0 : index
    %81 = vector.load %arg9[%c8, %c0_46] : memref<36x648xbf16, #tpu.memory_space<vmem>>, vector<4x648xbf16>
    tpu.vector_store %arg9[%c8, %c0_46], %80 {strides = array<i32>} : memref<36x648xbf16, #tpu.memory_space<vmem>>, vector<4x648xbf16>,
    %c0_47 = arith.constant 0 : index
    %c127 = arith.constant 127 : index
    %82 = vector.load %arg8[%c0_47, %c127] : memref<4x904xbf16, #tpu.memory_space<vmem>>, vector<4x648xbf16>
    %c12 = arith.constant 12 : index
    %c0_48 = arith.constant 0 : index
    %83 = vector.load %arg9[%c12, %c0_48] : memref<36x648xbf16, #tpu.memory_space<vmem>>, vector<4x648xbf16>
    tpu.vector_store %arg9[%c12, %c0_48], %82 {strides = array<i32>} : memref<36x648xbf16, #tpu.memory_space<vmem>>, vector<4x648xbf16>,
    %c0_49 = arith.constant 0 : index
    %c128 = arith.constant 128 : index
    %84 = vector.load %arg8[%c0_49, %c128] : memref<4x904xbf16, #tpu.memory_space<vmem>>, vector<4x648xbf16>
    %c16 = arith.constant 16 : index
    %c0_50 = arith.constant 0 : index
    %85 = vector.load %arg9[%c16, %c0_50] : memref<36x648xbf16, #tpu.memory_space<vmem>>, vector<4x648xbf16>
    tpu.vector_store %arg9[%c16, %c0_50], %84 {strides = array<i32>} : memref<36x648xbf16, #tpu.memory_space<vmem>>, vector<4x648xbf16>,
    %c0_51 = arith.constant 0 : index
    %c129 = arith.constant 129 : index
    %86 = vector.load %arg8[%c0_51, %c129] : memref<4x904xbf16, #tpu.memory_space<vmem>>, vector<4x648xbf16>
    %c20 = arith.constant 20 : index
    %c0_52 = arith.constant 0 : index
    %87 = vector.load %arg9[%c20, %c0_52] : memref<36x648xbf16, #tpu.memory_space<vmem>>, vector<4x648xbf16>
    tpu.vector_store %arg9[%c20, %c0_52], %86 {strides = array<i32>} : memref<36x648xbf16, #tpu.memory_space<vmem>>, vector<4x648xbf16>,
    %c0_53 = arith.constant 0 : index
    %c145 = arith.constant 145 : index
    %88 = vector.load %arg8[%c0_53, %c145] : memref<4x904xbf16, #tpu.memory_space<vmem>>, vector<4x648xbf16>
    %c24 = arith.constant 24 : index
    %c0_54 = arith.constant 0 : index
    %89 = vector.load %arg9[%c24, %c0_54] : memref<36x648xbf16, #tpu.memory_space<vmem>>, vector<4x648xbf16>
    tpu.vector_store %arg9[%c24, %c0_54], %88 {strides = array<i32>} : memref<36x648xbf16, #tpu.memory_space<vmem>>, vector<4x648xbf16>,
    %c0_55 = arith.constant 0 : index
    %c146 = arith.constant 146 : index
    %90 = vector.load %arg8[%c0_55, %c146] : memref<4x904xbf16, #tpu.memory_space<vmem>>, vector<4x648xbf16>
    %c28 = arith.constant 28 : index
    %c0_56 = arith.constant 0 : index
    %91 = vector.load %arg9[%c28, %c0_56] : memref<36x648xbf16, #tpu.memory_space<vmem>>, vector<4x648xbf16>
    tpu.vector_store %arg9[%c28, %c0_56], %90 {strides = array<i32>} : memref<36x648xbf16, #tpu.memory_space<vmem>>, vector<4x648xbf16>,
    %c0_57 = arith.constant 0 : index
    %c147_58 = arith.constant 147 : index
    %92 = vector.load %arg8[%c0_57, %c147_58] : memref<4x904xbf16, #tpu.memory_space<vmem>>, vector<4x648xbf16>
    %c32 = arith.constant 32 : index
    %c0_59 = arith.constant 0 : index
    %93 = vector.load %arg9[%c32, %c0_59] : memref<36x648xbf16, #tpu.memory_space<vmem>>, vector<4x648xbf16>
    tpu.vector_store %arg9[%c32, %c0_59], %92 {strides = array<i32>} : memref<36x648xbf16, #tpu.memory_space<vmem>>, vector<4x648xbf16>,
    %c0_60 = arith.constant 0 : index
    %c0_61 = arith.constant 0 : index
    %94 = vector.load %arg2[%c0_60, %c0_61] : memref<4x36xbf16, #tpu.memory_space<vmem>>, vector<4x36xbf16>
    %c0_62 = arith.constant 0 : index
    %c0_63 = arith.constant 0 : index
    %95 = vector.load %arg9[%c0_62, %c0_63] : memref<36x648xbf16, #tpu.memory_space<vmem>>, vector<36x648xbf16>
    %cst_64 = arith.constant dense<0.000000e+00> : vector<4x648xf32>
    %96 = tpu.matmul %94, %95, %cst_64 {dimension_numbers = #tpu.dot_dimension_numbers<[1], [0], [0], [1], [0, 0, 1, 1], [], []>} : vector<4x36xbf16>, vector<36x648xbf16>, vector<4x648xf32> -> vector<4x648xf32>
    %c0_65 = arith.constant 0 : index
    %c0_66 = arith.constant 0 : index
    %97 = vector.load %arg3[%c0_65, %c0_66] : memref<4x1xf32, #tpu.memory_space<vmem>>, vector<4x1xf32>
    %98 = vector.broadcast %97 : vector<4x1xf32> to vector<4x648xf32>
    %99 = arith.addf %96, %98 : vector<4x648xf32>
    %cst_67 = arith.constant 0.000000e+00 : f32
    %100 = vector.broadcast %cst_67 : f32 to vector<4x648xf32>
    %101 = arith.maximumf %99, %100 : vector<4x648xf32>
    %c0_68 = arith.constant 0 : index
    %c0_69 = arith.constant 0 : index
    %102 = vector.load %arg6[%c0_68, %c0_69] : memref<1x648xf32, #tpu.memory_space<vmem>>, vector<1x648xf32>
    %103 = vector.broadcast %102 : vector<1x648xf32> to vector<4x648xf32>
    %104 = arith.mulf %101, %103 : vector<4x648xf32>
    %105 = arith.truncf %104 : vector<4x648xf32> to vector<4x648xbf16>
    %c0_70 = arith.constant 0 : index
    %c128_71 = arith.constant 128 : index
    %106 = vector.load %arg8[%c0_70, %c128_71] : memref<4x904xbf16, #tpu.memory_space<vmem>>, vector<4x648xbf16>
    tpu.vector_store %arg8[%c0_70, %c128_71], %105 {strides = array<i32>} : memref<4x904xbf16, #tpu.memory_space<vmem>>, vector<4x648xbf16>,
    %c0_72 = arith.constant 0 : index
    %c109_73 = arith.constant 109 : index
    %107 = vector.load %arg8[%c0_72, %c109_73] : memref<4x904xbf16, #tpu.memory_space<vmem>>, vector<4x648xbf16>
    %c0_74 = arith.constant 0 : index
    %c0_75 = arith.constant 0 : index
    %108 = vector.load %arg9[%c0_74, %c0_75] : memref<36x648xbf16, #tpu.memory_space<vmem>>, vector<4x648xbf16>
    tpu.vector_store %arg9[%c0_74, %c0_75], %107 {strides = array<i32>} : memref<36x648xbf16, #tpu.memory_space<vmem>>, vector<4x648xbf16>,
    %c0_76 = arith.constant 0 : index
    %c110_77 = arith.constant 110 : index
    %109 = vector.load %arg8[%c0_76, %c110_77] : memref<4x904xbf16, #tpu.memory_space<vmem>>, vector<4x648xbf16>
    %c4_78 = arith.constant 4 : index
    %c0_79 = arith.constant 0 : index
    %110 = vector.load %arg9[%c4_78, %c0_79] : memref<36x648xbf16, #tpu.memory_space<vmem>>, vector<4x648xbf16>
    tpu.vector_store %arg9[%c4_78, %c0_79], %109 {strides = array<i32>} : memref<36x648xbf16, #tpu.memory_space<vmem>>, vector<4x648xbf16>,
    %c0_80 = arith.constant 0 : index
    %c111_81 = arith.constant 111 : index
    %111 = vector.load %arg8[%c0_80, %c111_81] : memref<4x904xbf16, #tpu.memory_space<vmem>>, vector<4x648xbf16>
    %c8_82 = arith.constant 8 : index
    %c0_83 = arith.constant 0 : index
    %112 = vector.load %arg9[%c8_82, %c0_83] : memref<36x648xbf16, #tpu.memory_space<vmem>>, vector<4x648xbf16>
    tpu.vector_store %arg9[%c8_82, %c0_83], %111 {strides = array<i32>} : memref<36x648xbf16, #tpu.memory_space<vmem>>, vector<4x648xbf16>,
    %c0_84 = arith.constant 0 : index
    %c127_85 = arith.constant 127 : index
    %113 = vector.load %arg8[%c0_84, %c127_85] : memref<4x904xbf16, #tpu.memory_space<vmem>>, vector<4x648xbf16>
    %c12_86 = arith.constant 12 : index
    %c0_87 = arith.constant 0 : index
    %114 = vector.load %arg9[%c12_86, %c0_87] : memref<36x648xbf16, #tpu.memory_space<vmem>>, vector<4x648xbf16>
    tpu.vector_store %arg9[%c12_86, %c0_87], %113 {strides = array<i32>} : memref<36x648xbf16, #tpu.memory_space<vmem>>, vector<4x648xbf16>,
    %c0_88 = arith.constant 0 : index
    %c128_89 = arith.constant 128 : index
    %115 = vector.load %arg8[%c0_88, %c128_89] : memref<4x904xbf16, #tpu.memory_space<vmem>>, vector<4x648xbf16>
    %c16_90 = arith.constant 16 : index
    %c0_91 = arith.constant 0 : index
    %116 = vector.load %arg9[%c16_90, %c0_91] : memref<36x648xbf16, #tpu.memory_space<vmem>>, vector<4x648xbf16>
    tpu.vector_store %arg9[%c16_90, %c0_91], %115 {strides = array<i32>} : memref<36x648xbf16, #tpu.memory_space<vmem>>, vector<4x648xbf16>,
    %c0_92 = arith.constant 0 : index
    %c129_93 = arith.constant 129 : index
    %117 = vector.load %arg8[%c0_92, %c129_93] : memref<4x904xbf16, #tpu.memory_space<vmem>>, vector<4x648xbf16>
    %c20_94 = arith.constant 20 : index
    %c0_95 = arith.constant 0 : index
    %118 = vector.load %arg9[%c20_94, %c0_95] : memref<36x648xbf16, #tpu.memory_space<vmem>>, vector<4x648xbf16>
    tpu.vector_store %arg9[%c20_94, %c0_95], %117 {strides = array<i32>} : memref<36x648xbf16, #tpu.memory_space<vmem>>, vector<4x648xbf16>,
    %c0_96 = arith.constant 0 : index
    %c145_97 = arith.constant 145 : index
    %119 = vector.load %arg8[%c0_96, %c145_97] : memref<4x904xbf16, #tpu.memory_space<vmem>>, vector<4x648xbf16>
    %c24_98 = arith.constant 24 : index
    %c0_99 = arith.constant 0 : index
    %120 = vector.load %arg9[%c24_98, %c0_99] : memref<36x648xbf16, #tpu.memory_space<vmem>>, vector<4x648xbf16>
    tpu.vector_store %arg9[%c24_98, %c0_99], %119 {strides = array<i32>} : memref<36x648xbf16, #tpu.memory_space<vmem>>, vector<4x648xbf16>,
    %c0_100 = arith.constant 0 : index
    %c146_101 = arith.constant 146 : index
    %121 = vector.load %arg8[%c0_100, %c146_101] : memref<4x904xbf16, #tpu.memory_space<vmem>>, vector<4x648xbf16>
    %c28_102 = arith.constant 28 : index
    %c0_103 = arith.constant 0 : index
    %122 = vector.load %arg9[%c28_102, %c0_103] : memref<36x648xbf16, #tpu.memory_space<vmem>>, vector<4x648xbf16>
    tpu.vector_store %arg9[%c28_102, %c0_103], %121 {strides = array<i32>} : memref<36x648xbf16, #tpu.memory_space<vmem>>, vector<4x648xbf16>,
    %c0_104 = arith.constant 0 : index
    %c147_105 = arith.constant 147 : index
    %123 = vector.load %arg8[%c0_104, %c147_105] : memref<4x904xbf16, #tpu.memory_space<vmem>>, vector<4x648xbf16>
    %c32_106 = arith.constant 32 : index
    %c0_107 = arith.constant 0 : index
    %124 = vector.load %arg9[%c32_106, %c0_107] : memref<36x648xbf16, #tpu.memory_space<vmem>>, vector<4x648xbf16>
    tpu.vector_store %arg9[%c32_106, %c0_107], %123 {strides = array<i32>} : memref<36x648xbf16, #tpu.memory_space<vmem>>, vector<4x648xbf16>,
    %c0_108 = arith.constant 0 : index
    %c0_109 = arith.constant 0 : index
    %125 = vector.load %arg4[%c0_108, %c0_109] : memref<4x36xbf16, #tpu.memory_space<vmem>>, vector<4x36xbf16>
    %c0_110 = arith.constant 0 : index
    %c0_111 = arith.constant 0 : index
    %126 = vector.load %arg9[%c0_110, %c0_111] : memref<36x648xbf16, #tpu.memory_space<vmem>>, vector<36x648xbf16>
    %cst_112 = arith.constant dense<0.000000e+00> : vector<4x648xf32>
    %127 = tpu.matmul %125, %126, %cst_112 {dimension_numbers = #tpu.dot_dimension_numbers<[1], [0], [0], [1], [0, 0, 1, 1], [], []>} : vector<4x36xbf16>, vector<36x648xbf16>, vector<4x648xf32> -> vector<4x648xf32>
    %c0_113 = arith.constant 0 : index
    %c0_114 = arith.constant 0 : index
    %128 = vector.load %arg5[%c0_113, %c0_114] : memref<4x1xf32, #tpu.memory_space<vmem>>, vector<4x1xf32>
    %129 = vector.broadcast %128 : vector<4x1xf32> to vector<4x648xf32>
    %130 = arith.addf %127, %129 : vector<4x648xf32>
    %c0_115 = arith.constant 0 : index
    %c0_116 = arith.constant 0 : index
    %c0_117 = arith.constant 0 : index
    %131 = vector.load %arg1[%c0_115, %c0_116, %c0_117] : memref<2x4x256xf32, #tpu.memory_space<vmem>>, vector<1x4x256xf32>
    %132 = vector.shape_cast %131 : vector<1x4x256xf32> to vector<4x256xf32>
    %133 = vector.extract_strided_slice %130 {offsets = [0, 19], sizes = [4, 16], strides = [1, 1]} : vector<4x648xf32> to vector<4x16xf32>
    %134 = vector.extract_strided_slice %132 {offsets = [0, 0], sizes = [4, 16], strides = [1, 1]} : vector<4x256xf32> to vector<4x16xf32>
    %135 = arith.addf %133, %134 : vector<4x16xf32>
    %c0_118 = arith.constant 0 : index
    %c0_119 = arith.constant 0 : index
    %c0_120 = arith.constant 0 : index
    %136 = vector.load %arg7[%c0_118, %c0_119, %c0_120] : memref<2x4x256xf32, #tpu.memory_space<vmem>>, vector<1x4x16xf32>
    %137 = vector.shape_cast %136 : vector<1x4x16xf32> to vector<4x16xf32>
    %138 = vector.shape_cast %135 : vector<4x16xf32> to vector<1x4x16xf32>
    tpu.vector_store %arg7[%c0_118, %c0_119, %c0_120], %138 {strides = array<i32>} : memref<2x4x256xf32, #tpu.memory_space<vmem>>, vector<1x4x16xf32>,
    %139 = vector.extract_strided_slice %130 {offsets = [0, 37], sizes = [4, 16], strides = [1, 1]} : vector<4x648xf32> to vector<4x16xf32>
    %140 = vector.extract_strided_slice %132 {offsets = [0, 16], sizes = [4, 16], strides = [1, 1]} : vector<4x256xf32> to vector<4x16xf32>
    %141 = arith.addf %139, %140 : vector<4x16xf32>
    %c0_121 = arith.constant 0 : index
    %c0_122 = arith.constant 0 : index
    %c16_123 = arith.constant 16 : index
    %142 = vector.load %arg7[%c0_121, %c0_122, %c16_123] : memref<2x4x256xf32, #tpu.memory_space<vmem>>, vector<1x4x16xf32>
    %143 = vector.shape_cast %142 : vector<1x4x16xf32> to vector<4x16xf32>
    %144 = vector.shape_cast %141 : vector<4x16xf32> to vector<1x4x16xf32>
    tpu.vector_store %arg7[%c0_121, %c0_122, %c16_123], %144 {strides = array<i32>} : memref<2x4x256xf32, #tpu.memory_space<vmem>>, vector<1x4x16xf32>,
    %145 = vector.extract_strided_slice %130 {offsets = [0, 55], sizes = [4, 16], strides = [1, 1]} : vector<4x648xf32> to vector<4x16xf32>
    %146 = vector.extract_strided_slice %132 {offsets = [0, 32], sizes = [4, 16], strides = [1, 1]} : vector<4x256xf32> to vector<4x16xf32>
    %147 = arith.addf %145, %146 : vector<4x16xf32>
    %c0_124 = arith.constant 0 : index
    %c0_125 = arith.constant 0 : index
    %c32_126 = arith.constant 32 : index
    %148 = vector.load %arg7[%c0_124, %c0_125, %c32_126] : memref<2x4x256xf32, #tpu.memory_space<vmem>>, vector<1x4x16xf32>
    %149 = vector.shape_cast %148 : vector<1x4x16xf32> to vector<4x16xf32>
    %150 = vector.shape_cast %147 : vector<4x16xf32> to vector<1x4x16xf32>
    tpu.vector_store %arg7[%c0_124, %c0_125, %c32_126], %150 {strides = array<i32>} : memref<2x4x256xf32, #tpu.memory_space<vmem>>, vector<1x4x16xf32>,
    %151 = vector.extract_strided_slice %130 {offsets = [0, 73], sizes = [4, 16], strides = [1, 1]} : vector<4x648xf32> to vector<4x16xf32>
    %152 = vector.extract_strided_slice %132 {offsets = [0, 48], sizes = [4, 16], strides = [1, 1]} : vector<4x256xf32> to vector<4x16xf32>
    %153 = arith.addf %151, %152 : vector<4x16xf32>
    %c0_127 = arith.constant 0 : index
    %c0_128 = arith.constant 0 : index
    %c48 = arith.constant 48 : index
    %154 = vector.load %arg7[%c0_127, %c0_128, %c48] : memref<2x4x256xf32, #tpu.memory_space<vmem>>, vector<1x4x16xf32>
    %155 = vector.shape_cast %154 : vector<1x4x16xf32> to vector<4x16xf32>
    %156 = vector.shape_cast %153 : vector<4x16xf32> to vector<1x4x16xf32>
    tpu.vector_store %arg7[%c0_127, %c0_128, %c48], %156 {strides = array<i32>} : memref<2x4x256xf32, #tpu.memory_space<vmem>>, vector<1x4x16xf32>,
    %157 = vector.extract_strided_slice %130 {offsets = [0, 91], sizes = [4, 16], strides = [1, 1]} : vector<4x648xf32> to vector<4x16xf32>
    %158 = vector.extract_strided_slice %132 {offsets = [0, 64], sizes = [4, 16], strides = [1, 1]} : vector<4x256xf32> to vector<4x16xf32>
    %159 = arith.addf %157, %158 : vector<4x16xf32>
    %c0_129 = arith.constant 0 : index
    %c0_130 = arith.constant 0 : index
    %c64 = arith.constant 64 : index
    %160 = vector.load %arg7[%c0_129, %c0_130, %c64] : memref<2x4x256xf32, #tpu.memory_space<vmem>>, vector<1x4x16xf32>
    %161 = vector.shape_cast %160 : vector<1x4x16xf32> to vector<4x16xf32>
    %162 = vector.shape_cast %159 : vector<4x16xf32> to vector<1x4x16xf32>
    tpu.vector_store %arg7[%c0_129, %c0_130, %c64], %162 {strides = array<i32>} : memref<2x4x256xf32, #tpu.memory_space<vmem>>, vector<1x4x16xf32>,
    %163 = vector.extract_strided_slice %130 {offsets = [0, 109], sizes = [4, 16], strides = [1, 1]} : vector<4x648xf32> to vector<4x16xf32>
    %164 = vector.extract_strided_slice %132 {offsets = [0, 80], sizes = [4, 16], strides = [1, 1]} : vector<4x256xf32> to vector<4x16xf32>
    %165 = arith.addf %163, %164 : vector<4x16xf32>
    %c0_131 = arith.constant 0 : index
    %c0_132 = arith.constant 0 : index
    %c80 = arith.constant 80 : index
    %166 = vector.load %arg7[%c0_131, %c0_132, %c80] : memref<2x4x256xf32, #tpu.memory_space<vmem>>, vector<1x4x16xf32>
    %167 = vector.shape_cast %166 : vector<1x4x16xf32> to vector<4x16xf32>
    %168 = vector.shape_cast %165 : vector<4x16xf32> to vector<1x4x16xf32>
    tpu.vector_store %arg7[%c0_131, %c0_132, %c80], %168 {strides = array<i32>} : memref<2x4x256xf32, #tpu.memory_space<vmem>>, vector<1x4x16xf32>,
    %169 = vector.extract_strided_slice %130 {offsets = [0, 127], sizes = [4, 16], strides = [1, 1]} : vector<4x648xf32> to vector<4x16xf32>
    %170 = vector.extract_strided_slice %132 {offsets = [0, 96], sizes = [4, 16], strides = [1, 1]} : vector<4x256xf32> to vector<4x16xf32>
    %171 = arith.addf %169, %170 : vector<4x16xf32>
    %c0_133 = arith.constant 0 : index
    %c0_134 = arith.constant 0 : index
    %c96 = arith.constant 96 : index
    %172 = vector.load %arg7[%c0_133, %c0_134, %c96] : memref<2x4x256xf32, #tpu.memory_space<vmem>>, vector<1x4x16xf32>
    %173 = vector.shape_cast %172 : vector<1x4x16xf32> to vector<4x16xf32>
    %174 = vector.shape_cast %171 : vector<4x16xf32> to vector<1x4x16xf32>
    tpu.vector_store %arg7[%c0_133, %c0_134, %c96], %174 {strides = array<i32>} : memref<2x4x256xf32, #tpu.memory_space<vmem>>, vector<1x4x16xf32>,
    %175 = vector.extract_strided_slice %130 {offsets = [0, 145], sizes = [4, 16], strides = [1, 1]} : vector<4x648xf32> to vector<4x16xf32>
    %176 = vector.extract_strided_slice %132 {offsets = [0, 112], sizes = [4, 16], strides = [1, 1]} : vector<4x256xf32> to vector<4x16xf32>
    %177 = arith.addf %175, %176 : vector<4x16xf32>
    %c0_135 = arith.constant 0 : index
    %c0_136 = arith.constant 0 : index
    %c112 = arith.constant 112 : index
    %178 = vector.load %arg7[%c0_135, %c0_136, %c112] : memref<2x4x256xf32, #tpu.memory_space<vmem>>, vector<1x4x16xf32>
    %179 = vector.shape_cast %178 : vector<1x4x16xf32> to vector<4x16xf32>
    %180 = vector.shape_cast %177 : vector<4x16xf32> to vector<1x4x16xf32>
    tpu.vector_store %arg7[%c0_135, %c0_136, %c112], %180 {strides = array<i32>} : memref<2x4x256xf32, #tpu.memory_space<vmem>>, vector<1x4x16xf32>,
    %181 = vector.extract_strided_slice %130 {offsets = [0, 163], sizes = [4, 16], strides = [1, 1]} : vector<4x648xf32> to vector<4x16xf32>
    %182 = vector.extract_strided_slice %132 {offsets = [0, 128], sizes = [4, 16], strides = [1, 1]} : vector<4x256xf32> to vector<4x16xf32>
    %183 = arith.addf %181, %182 : vector<4x16xf32>
    %c0_137 = arith.constant 0 : index
    %c0_138 = arith.constant 0 : index
    %c128_139 = arith.constant 128 : index
    %184 = vector.load %arg7[%c0_137, %c0_138, %c128_139] : memref<2x4x256xf32, #tpu.memory_space<vmem>>, vector<1x4x16xf32>
    %185 = vector.shape_cast %184 : vector<1x4x16xf32> to vector<4x16xf32>
    %186 = vector.shape_cast %183 : vector<4x16xf32> to vector<1x4x16xf32>
    tpu.vector_store %arg7[%c0_137, %c0_138, %c128_139], %186 {strides = array<i32>} : memref<2x4x256xf32, #tpu.memory_space<vmem>>, vector<1x4x16xf32>,
    %187 = vector.extract_strided_slice %130 {offsets = [0, 181], sizes = [4, 16], strides = [1, 1]} : vector<4x648xf32> to vector<4x16xf32>
    %188 = vector.extract_strided_slice %132 {offsets = [0, 144], sizes = [4, 16], strides = [1, 1]} : vector<4x256xf32> to vector<4x16xf32>
    %189 = arith.addf %187, %188 : vector<4x16xf32>
    %c0_140 = arith.constant 0 : index
    %c0_141 = arith.constant 0 : index
    %c144 = arith.constant 144 : index
    %190 = vector.load %arg7[%c0_140, %c0_141, %c144] : memref<2x4x256xf32, #tpu.memory_space<vmem>>, vector<1x4x16xf32>
    %191 = vector.shape_cast %190 : vector<1x4x16xf32> to vector<4x16xf32>
    %192 = vector.shape_cast %189 : vector<4x16xf32> to vector<1x4x16xf32>
    tpu.vector_store %arg7[%c0_140, %c0_141, %c144], %192 {strides = array<i32>} : memref<2x4x256xf32, #tpu.memory_space<vmem>>, vector<1x4x16xf32>,
    %193 = vector.extract_strided_slice %130 {offsets = [0, 199], sizes = [4, 16], strides = [1, 1]} : vector<4x648xf32> to vector<4x16xf32>
    %194 = vector.extract_strided_slice %132 {offsets = [0, 160], sizes = [4, 16], strides = [1, 1]} : vector<4x256xf32> to vector<4x16xf32>
    %195 = arith.addf %193, %194 : vector<4x16xf32>
    %c0_142 = arith.constant 0 : index
    %c0_143 = arith.constant 0 : index
    %c160 = arith.constant 160 : index
    %196 = vector.load %arg7[%c0_142, %c0_143, %c160] : memref<2x4x256xf32, #tpu.memory_space<vmem>>, vector<1x4x16xf32>
    %197 = vector.shape_cast %196 : vector<1x4x16xf32> to vector<4x16xf32>
    %198 = vector.shape_cast %195 : vector<4x16xf32> to vector<1x4x16xf32>
    tpu.vector_store %arg7[%c0_142, %c0_143, %c160], %198 {strides = array<i32>} : memref<2x4x256xf32, #tpu.memory_space<vmem>>, vector<1x4x16xf32>,
    %199 = vector.extract_strided_slice %130 {offsets = [0, 217], sizes = [4, 16], strides = [1, 1]} : vector<4x648xf32> to vector<4x16xf32>
    %200 = vector.extract_strided_slice %132 {offsets = [0, 176], sizes = [4, 16], strides = [1, 1]} : vector<4x256xf32> to vector<4x16xf32>
    %201 = arith.addf %199, %200 : vector<4x16xf32>
    %c0_144 = arith.constant 0 : index
    %c0_145 = arith.constant 0 : index
    %c176 = arith.constant 176 : index
    %202 = vector.load %arg7[%c0_144, %c0_145, %c176] : memref<2x4x256xf32, #tpu.memory_space<vmem>>, vector<1x4x16xf32>
    %203 = vector.shape_cast %202 : vector<1x4x16xf32> to vector<4x16xf32>
    %204 = vector.shape_cast %201 : vector<4x16xf32> to vector<1x4x16xf32>
    tpu.vector_store %arg7[%c0_144, %c0_145, %c176], %204 {strides = array<i32>} : memref<2x4x256xf32, #tpu.memory_space<vmem>>, vector<1x4x16xf32>,
    %205 = vector.extract_strided_slice %130 {offsets = [0, 235], sizes = [4, 16], strides = [1, 1]} : vector<4x648xf32> to vector<4x16xf32>
    %206 = vector.extract_strided_slice %132 {offsets = [0, 192], sizes = [4, 16], strides = [1, 1]} : vector<4x256xf32> to vector<4x16xf32>
    %207 = arith.addf %205, %206 : vector<4x16xf32>
    %c0_146 = arith.constant 0 : index
    %c0_147 = arith.constant 0 : index
    %c192 = arith.constant 192 : index
    %208 = vector.load %arg7[%c0_146, %c0_147, %c192] : memref<2x4x256xf32, #tpu.memory_space<vmem>>, vector<1x4x16xf32>
    %209 = vector.shape_cast %208 : vector<1x4x16xf32> to vector<4x16xf32>
    %210 = vector.shape_cast %207 : vector<4x16xf32> to vector<1x4x16xf32>
    tpu.vector_store %arg7[%c0_146, %c0_147, %c192], %210 {strides = array<i32>} : memref<2x4x256xf32, #tpu.memory_space<vmem>>, vector<1x4x16xf32>,
    %211 = vector.extract_strided_slice %130 {offsets = [0, 253], sizes = [4, 16], strides = [1, 1]} : vector<4x648xf32> to vector<4x16xf32>
    %212 = vector.extract_strided_slice %132 {offsets = [0, 208], sizes = [4, 16], strides = [1, 1]} : vector<4x256xf32> to vector<4x16xf32>
    %213 = arith.addf %211, %212 : vector<4x16xf32>
    %c0_148 = arith.constant 0 : index
    %c0_149 = arith.constant 0 : index
    %c208 = arith.constant 208 : index
    %214 = vector.load %arg7[%c0_148, %c0_149, %c208] : memref<2x4x256xf32, #tpu.memory_space<vmem>>, vector<1x4x16xf32>
    %215 = vector.shape_cast %214 : vector<1x4x16xf32> to vector<4x16xf32>
    %216 = vector.shape_cast %213 : vector<4x16xf32> to vector<1x4x16xf32>
    tpu.vector_store %arg7[%c0_148, %c0_149, %c208], %216 {strides = array<i32>} : memref<2x4x256xf32, #tpu.memory_space<vmem>>, vector<1x4x16xf32>,
    %217 = vector.extract_strided_slice %130 {offsets = [0, 271], sizes = [4, 16], strides = [1, 1]} : vector<4x648xf32> to vector<4x16xf32>
    %218 = vector.extract_strided_slice %132 {offsets = [0, 224], sizes = [4, 16], strides = [1, 1]} : vector<4x256xf32> to vector<4x16xf32>
    %219 = arith.addf %217, %218 : vector<4x16xf32>
    %c0_150 = arith.constant 0 : index
    %c0_151 = arith.constant 0 : index
    %c224 = arith.constant 224 : index
    %220 = vector.load %arg7[%c0_150, %c0_151, %c224] : memref<2x4x256xf32, #tpu.memory_space<vmem>>, vector<1x4x16xf32>
    %221 = vector.shape_cast %220 : vector<1x4x16xf32> to vector<4x16xf32>
    %222 = vector.shape_cast %219 : vector<4x16xf32> to vector<1x4x16xf32>
    tpu.vector_store %arg7[%c0_150, %c0_151, %c224], %222 {strides = array<i32>} : memref<2x4x256xf32, #tpu.memory_space<vmem>>, vector<1x4x16xf32>,
    %223 = vector.extract_strided_slice %130 {offsets = [0, 289], sizes = [4, 16], strides = [1, 1]} : vector<4x648xf32> to vector<4x16xf32>
    %224 = vector.extract_strided_slice %132 {offsets = [0, 240], sizes = [4, 16], strides = [1, 1]} : vector<4x256xf32> to vector<4x16xf32>
    %225 = arith.addf %223, %224 : vector<4x16xf32>
    %c0_152 = arith.constant 0 : index
    %c0_153 = arith.constant 0 : index
    %c240 = arith.constant 240 : index
    %226 = vector.load %arg7[%c0_152, %c0_153, %c240] : memref<2x4x256xf32, #tpu.memory_space<vmem>>, vector<1x4x16xf32>
    %227 = vector.shape_cast %226 : vector<1x4x16xf32> to vector<4x16xf32>
    %228 = vector.shape_cast %225 : vector<4x16xf32> to vector<1x4x16xf32>
    tpu.vector_store %arg7[%c0_152, %c0_153, %c240], %228 {strides = array<i32>} : memref<2x4x256xf32, #tpu.memory_space<vmem>>, vector<1x4x16xf32>,
    %c1_154 = arith.constant 1 : index
    %c0_155 = arith.constant 0 : index
    %c0_156 = arith.constant 0 : index
    %229 = vector.load %arg1[%c1_154, %c0_155, %c0_156] : memref<2x4x256xf32, #tpu.memory_space<vmem>>, vector<1x4x256xf32>
    %230 = vector.shape_cast %229 : vector<1x4x256xf32> to vector<4x256xf32>
    %231 = vector.extract_strided_slice %130 {offsets = [0, 343], sizes = [4, 16], strides = [1, 1]} : vector<4x648xf32> to vector<4x16xf32>
    %232 = vector.extract_strided_slice %230 {offsets = [0, 0], sizes = [4, 16], strides = [1, 1]} : vector<4x256xf32> to vector<4x16xf32>
    %233 = arith.addf %231, %232 : vector<4x16xf32>
    %c1_157 = arith.constant 1 : index
    %c0_158 = arith.constant 0 : index
    %c0_159 = arith.constant 0 : index
    %234 = vector.load %arg7[%c1_157, %c0_158, %c0_159] : memref<2x4x256xf32, #tpu.memory_space<vmem>>, vector<1x4x16xf32>
    %235 = vector.shape_cast %234 : vector<1x4x16xf32> to vector<4x16xf32>
    %236 = vector.shape_cast %233 : vector<4x16xf32> to vector<1x4x16xf32>
    tpu.vector_store %arg7[%c1_157, %c0_158, %c0_159], %236 {strides = array<i32>} : memref<2x4x256xf32, #tpu.memory_space<vmem>>, vector<1x4x16xf32>,
    %237 = vector.extract_strided_slice %130 {offsets = [0, 361], sizes = [4, 16], strides = [1, 1]} : vector<4x648xf32> to vector<4x16xf32>
    %238 = vector.extract_strided_slice %230 {offsets = [0, 16], sizes = [4, 16], strides = [1, 1]} : vector<4x256xf32> to vector<4x16xf32>
    %239 = arith.addf %237, %238 : vector<4x16xf32>
    %c1_160 = arith.constant 1 : index
    %c0_161 = arith.constant 0 : index
    %c16_162 = arith.constant 16 : index
    %240 = vector.load %arg7[%c1_160, %c0_161, %c16_162] : memref<2x4x256xf32, #tpu.memory_space<vmem>>, vector<1x4x16xf32>
    %241 = vector.shape_cast %240 : vector<1x4x16xf32> to vector<4x16xf32>
    %242 = vector.shape_cast %239 : vector<4x16xf32> to vector<1x4x16xf32>
    tpu.vector_store %arg7[%c1_160, %c0_161, %c16_162], %242 {strides = array<i32>} : memref<2x4x256xf32, #tpu.memory_space<vmem>>, vector<1x4x16xf32>,
    %243 = vector.extract_strided_slice %130 {offsets = [0, 379], sizes = [4, 16], strides = [1, 1]} : vector<4x648xf32> to vector<4x16xf32>
    %244 = vector.extract_strided_slice %230 {offsets = [0, 32], sizes = [4, 16], strides = [1, 1]} : vector<4x256xf32> to vector<4x16xf32>
    %245 = arith.addf %243, %244 : vector<4x16xf32>
    %c1_163 = arith.constant 1 : index
    %c0_164 = arith.constant 0 : index
    %c32_165 = arith.constant 32 : index
    %246 = vector.load %arg7[%c1_163, %c0_164, %c32_165] : memref<2x4x256xf32, #tpu.memory_space<vmem>>, vector<1x4x16xf32>
    %247 = vector.shape_cast %246 : vector<1x4x16xf32> to vector<4x16xf32>
    %248 = vector.shape_cast %245 : vector<4x16xf32> to vector<1x4x16xf32>
    tpu.vector_store %arg7[%c1_163, %c0_164, %c32_165], %248 {strides = array<i32>} : memref<2x4x256xf32, #tpu.memory_space<vmem>>, vector<1x4x16xf32>,
    %249 = vector.extract_strided_slice %130 {offsets = [0, 397], sizes = [4, 16], strides = [1, 1]} : vector<4x648xf32> to vector<4x16xf32>
    %250 = vector.extract_strided_slice %230 {offsets = [0, 48], sizes = [4, 16], strides = [1, 1]} : vector<4x256xf32> to vector<4x16xf32>
    %251 = arith.addf %249, %250 : vector<4x16xf32>
    %c1_166 = arith.constant 1 : index
    %c0_167 = arith.constant 0 : index
    %c48_168 = arith.constant 48 : index
    %252 = vector.load %arg7[%c1_166, %c0_167, %c48_168] : memref<2x4x256xf32, #tpu.memory_space<vmem>>, vector<1x4x16xf32>
    %253 = vector.shape_cast %252 : vector<1x4x16xf32> to vector<4x16xf32>
    %254 = vector.shape_cast %251 : vector<4x16xf32> to vector<1x4x16xf32>
    tpu.vector_store %arg7[%c1_166, %c0_167, %c48_168], %254 {strides = array<i32>} : memref<2x4x256xf32, #tpu.memory_space<vmem>>, vector<1x4x16xf32>,
    %255 = vector.extract_strided_slice %130 {offsets = [0, 415], sizes = [4, 16], strides = [1, 1]} : vector<4x648xf32> to vector<4x16xf32>
    %256 = vector.extract_strided_slice %230 {offsets = [0, 64], sizes = [4, 16], strides = [1, 1]} : vector<4x256xf32> to vector<4x16xf32>
    %257 = arith.addf %255, %256 : vector<4x16xf32>
    %c1_169 = arith.constant 1 : index
    %c0_170 = arith.constant 0 : index
    %c64_171 = arith.constant 64 : index
    %258 = vector.load %arg7[%c1_169, %c0_170, %c64_171] : memref<2x4x256xf32, #tpu.memory_space<vmem>>, vector<1x4x16xf32>
    %259 = vector.shape_cast %258 : vector<1x4x16xf32> to vector<4x16xf32>
    %260 = vector.shape_cast %257 : vector<4x16xf32> to vector<1x4x16xf32>
    tpu.vector_store %arg7[%c1_169, %c0_170, %c64_171], %260 {strides = array<i32>} : memref<2x4x256xf32, #tpu.memory_space<vmem>>, vector<1x4x16xf32>,
    %261 = vector.extract_strided_slice %130 {offsets = [0, 433], sizes = [4, 16], strides = [1, 1]} : vector<4x648xf32> to vector<4x16xf32>
    %262 = vector.extract_strided_slice %230 {offsets = [0, 80], sizes = [4, 16], strides = [1, 1]} : vector<4x256xf32> to vector<4x16xf32>
    %263 = arith.addf %261, %262 : vector<4x16xf32>
    %c1_172 = arith.constant 1 : index
    %c0_173 = arith.constant 0 : index
    %c80_174 = arith.constant 80 : index
    %264 = vector.load %arg7[%c1_172, %c0_173, %c80_174] : memref<2x4x256xf32, #tpu.memory_space<vmem>>, vector<1x4x16xf32>
    %265 = vector.shape_cast %264 : vector<1x4x16xf32> to vector<4x16xf32>
    %266 = vector.shape_cast %263 : vector<4x16xf32> to vector<1x4x16xf32>
    tpu.vector_store %arg7[%c1_172, %c0_173, %c80_174], %266 {strides = array<i32>} : memref<2x4x256xf32, #tpu.memory_space<vmem>>, vector<1x4x16xf32>,
    %267 = vector.extract_strided_slice %130 {offsets = [0, 451], sizes = [4, 16], strides = [1, 1]} : vector<4x648xf32> to vector<4x16xf32>
    %268 = vector.extract_strided_slice %230 {offsets = [0, 96], sizes = [4, 16], strides = [1, 1]} : vector<4x256xf32> to vector<4x16xf32>
    %269 = arith.addf %267, %268 : vector<4x16xf32>
    %c1_175 = arith.constant 1 : index
    %c0_176 = arith.constant 0 : index
    %c96_177 = arith.constant 96 : index
    %270 = vector.load %arg7[%c1_175, %c0_176, %c96_177] : memref<2x4x256xf32, #tpu.memory_space<vmem>>, vector<1x4x16xf32>
    %271 = vector.shape_cast %270 : vector<1x4x16xf32> to vector<4x16xf32>
    %272 = vector.shape_cast %269 : vector<4x16xf32> to vector<1x4x16xf32>
    tpu.vector_store %arg7[%c1_175, %c0_176, %c96_177], %272 {strides = array<i32>} : memref<2x4x256xf32, #tpu.memory_space<vmem>>, vector<1x4x16xf32>,
    %273 = vector.extract_strided_slice %130 {offsets = [0, 469], sizes = [4, 16], strides = [1, 1]} : vector<4x648xf32> to vector<4x16xf32>
    %274 = vector.extract_strided_slice %230 {offsets = [0, 112], sizes = [4, 16], strides = [1, 1]} : vector<4x256xf32> to vector<4x16xf32>
    %275 = arith.addf %273, %274 : vector<4x16xf32>
    %c1_178 = arith.constant 1 : index
    %c0_179 = arith.constant 0 : index
    %c112_180 = arith.constant 112 : index
    %276 = vector.load %arg7[%c1_178, %c0_179, %c112_180] : memref<2x4x256xf32, #tpu.memory_space<vmem>>, vector<1x4x16xf32>
    %277 = vector.shape_cast %276 : vector<1x4x16xf32> to vector<4x16xf32>
    %278 = vector.shape_cast %275 : vector<4x16xf32> to vector<1x4x16xf32>
    tpu.vector_store %arg7[%c1_178, %c0_179, %c112_180], %278 {strides = array<i32>} : memref<2x4x256xf32, #tpu.memory_space<vmem>>, vector<1x4x16xf32>,
    %279 = vector.extract_strided_slice %130 {offsets = [0, 487], sizes = [4, 16], strides = [1, 1]} : vector<4x648xf32> to vector<4x16xf32>
    %280 = vector.extract_strided_slice %230 {offsets = [0, 128], sizes = [4, 16], strides = [1, 1]} : vector<4x256xf32> to vector<4x16xf32>
    %281 = arith.addf %279, %280 : vector<4x16xf32>
    %c1_181 = arith.constant 1 : index
    %c0_182 = arith.constant 0 : index
    %c128_183 = arith.constant 128 : index
    %282 = vector.load %arg7[%c1_181, %c0_182, %c128_183] : memref<2x4x256xf32, #tpu.memory_space<vmem>>, vector<1x4x16xf32>
    %283 = vector.shape_cast %282 : vector<1x4x16xf32> to vector<4x16xf32>
    %284 = vector.shape_cast %281 : vector<4x16xf32> to vector<1x4x16xf32>
    tpu.vector_store %arg7[%c1_181, %c0_182, %c128_183], %284 {strides = array<i32>} : memref<2x4x256xf32, #tpu.memory_space<vmem>>, vector<1x4x16xf32>,
    %285 = vector.extract_strided_slice %130 {offsets = [0, 505], sizes = [4, 16], strides = [1, 1]} : vector<4x648xf32> to vector<4x16xf32>
    %286 = vector.extract_strided_slice %230 {offsets = [0, 144], sizes = [4, 16], strides = [1, 1]} : vector<4x256xf32> to vector<4x16xf32>
    %287 = arith.addf %285, %286 : vector<4x16xf32>
    %c1_184 = arith.constant 1 : index
    %c0_185 = arith.constant 0 : index
    %c144_186 = arith.constant 144 : index
    %288 = vector.load %arg7[%c1_184, %c0_185, %c144_186] : memref<2x4x256xf32, #tpu.memory_space<vmem>>, vector<1x4x16xf32>
    %289 = vector.shape_cast %288 : vector<1x4x16xf32> to vector<4x16xf32>
    %290 = vector.shape_cast %287 : vector<4x16xf32> to vector<1x4x16xf32>
    tpu.vector_store %arg7[%c1_184, %c0_185, %c144_186], %290 {strides = array<i32>} : memref<2x4x256xf32, #tpu.memory_space<vmem>>, vector<1x4x16xf32>,
    %291 = vector.extract_strided_slice %130 {offsets = [0, 523], sizes = [4, 16], strides = [1, 1]} : vector<4x648xf32> to vector<4x16xf32>
    %292 = vector.extract_strided_slice %230 {offsets = [0, 160], sizes = [4, 16], strides = [1, 1]} : vector<4x256xf32> to vector<4x16xf32>
    %293 = arith.addf %291, %292 : vector<4x16xf32>
    %c1_187 = arith.constant 1 : index
    %c0_188 = arith.constant 0 : index
    %c160_189 = arith.constant 160 : index
    %294 = vector.load %arg7[%c1_187, %c0_188, %c160_189] : memref<2x4x256xf32, #tpu.memory_space<vmem>>, vector<1x4x16xf32>
    %295 = vector.shape_cast %294 : vector<1x4x16xf32> to vector<4x16xf32>
    %296 = vector.shape_cast %293 : vector<4x16xf32> to vector<1x4x16xf32>
    tpu.vector_store %arg7[%c1_187, %c0_188, %c160_189], %296 {strides = array<i32>} : memref<2x4x256xf32, #tpu.memory_space<vmem>>, vector<1x4x16xf32>,
    %297 = vector.extract_strided_slice %130 {offsets = [0, 541], sizes = [4, 16], strides = [1, 1]} : vector<4x648xf32> to vector<4x16xf32>
    %298 = vector.extract_strided_slice %230 {offsets = [0, 176], sizes = [4, 16], strides = [1, 1]} : vector<4x256xf32> to vector<4x16xf32>
    %299 = arith.addf %297, %298 : vector<4x16xf32>
    %c1_190 = arith.constant 1 : index
    %c0_191 = arith.constant 0 : index
    %c176_192 = arith.constant 176 : index
    %300 = vector.load %arg7[%c1_190, %c0_191, %c176_192] : memref<2x4x256xf32, #tpu.memory_space<vmem>>, vector<1x4x16xf32>
    %301 = vector.shape_cast %300 : vector<1x4x16xf32> to vector<4x16xf32>
    %302 = vector.shape_cast %299 : vector<4x16xf32> to vector<1x4x16xf32>
    tpu.vector_store %arg7[%c1_190, %c0_191, %c176_192], %302 {strides = array<i32>} : memref<2x4x256xf32, #tpu.memory_space<vmem>>, vector<1x4x16xf32>,
    %303 = vector.extract_strided_slice %130 {offsets = [0, 559], sizes = [4, 16], strides = [1, 1]} : vector<4x648xf32> to vector<4x16xf32>
    %304 = vector.extract_strided_slice %230 {offsets = [0, 192], sizes = [4, 16], strides = [1, 1]} : vector<4x256xf32> to vector<4x16xf32>
    %305 = arith.addf %303, %304 : vector<4x16xf32>
    %c1_193 = arith.constant 1 : index
    %c0_194 = arith.constant 0 : index
    %c192_195 = arith.constant 192 : index
    %306 = vector.load %arg7[%c1_193, %c0_194, %c192_195] : memref<2x4x256xf32, #tpu.memory_space<vmem>>, vector<1x4x16xf32>
    %307 = vector.shape_cast %306 : vector<1x4x16xf32> to vector<4x16xf32>
    %308 = vector.shape_cast %305 : vector<4x16xf32> to vector<1x4x16xf32>
    tpu.vector_store %arg7[%c1_193, %c0_194, %c192_195], %308 {strides = array<i32>} : memref<2x4x256xf32, #tpu.memory_space<vmem>>, vector<1x4x16xf32>,
    %309 = vector.extract_strided_slice %130 {offsets = [0, 577], sizes = [4, 16], strides = [1, 1]} : vector<4x648xf32> to vector<4x16xf32>
    %310 = vector.extract_strided_slice %230 {offsets = [0, 208], sizes = [4, 16], strides = [1, 1]} : vector<4x256xf32> to vector<4x16xf32>
    %311 = arith.addf %309, %310 : vector<4x16xf32>
    %c1_196 = arith.constant 1 : index
    %c0_197 = arith.constant 0 : index
    %c208_198 = arith.constant 208 : index
    %312 = vector.load %arg7[%c1_196, %c0_197, %c208_198] : memref<2x4x256xf32, #tpu.memory_space<vmem>>, vector<1x4x16xf32>
    %313 = vector.shape_cast %312 : vector<1x4x16xf32> to vector<4x16xf32>
    %314 = vector.shape_cast %311 : vector<4x16xf32> to vector<1x4x16xf32>
    tpu.vector_store %arg7[%c1_196, %c0_197, %c208_198], %314 {strides = array<i32>} : memref<2x4x256xf32, #tpu.memory_space<vmem>>, vector<1x4x16xf32>,
    %315 = vector.extract_strided_slice %130 {offsets = [0, 595], sizes = [4, 16], strides = [1, 1]} : vector<4x648xf32> to vector<4x16xf32>
    %316 = vector.extract_strided_slice %230 {offsets = [0, 224], sizes = [4, 16], strides = [1, 1]} : vector<4x256xf32> to vector<4x16xf32>
    %317 = arith.addf %315, %316 : vector<4x16xf32>
    %c1_199 = arith.constant 1 : index
    %c0_200 = arith.constant 0 : index
    %c224_201 = arith.constant 224 : index
    %318 = vector.load %arg7[%c1_199, %c0_200, %c224_201] : memref<2x4x256xf32, #tpu.memory_space<vmem>>, vector<1x4x16xf32>
    %319 = vector.shape_cast %318 : vector<1x4x16xf32> to vector<4x16xf32>
    %320 = vector.shape_cast %317 : vector<4x16xf32> to vector<1x4x16xf32>
    tpu.vector_store %arg7[%c1_199, %c0_200, %c224_201], %320 {strides = array<i32>} : memref<2x4x256xf32, #tpu.memory_space<vmem>>, vector<1x4x16xf32>,
    %321 = vector.extract_strided_slice %130 {offsets = [0, 613], sizes = [4, 16], strides = [1, 1]} : vector<4x648xf32> to vector<4x16xf32>
    %322 = vector.extract_strided_slice %230 {offsets = [0, 240], sizes = [4, 16], strides = [1, 1]} : vector<4x256xf32> to vector<4x16xf32>
    %323 = arith.addf %321, %322 : vector<4x16xf32>
    %c1_202 = arith.constant 1 : index
    %c0_203 = arith.constant 0 : index
    %c240_204 = arith.constant 240 : index
    %324 = vector.load %arg7[%c1_202, %c0_203, %c240_204] : memref<2x4x256xf32, #tpu.memory_space<vmem>>, vector<1x4x16xf32>
    %325 = vector.shape_cast %324 : vector<1x4x16xf32> to vector<4x16xf32>
    %326 = vector.shape_cast %323 : vector<4x16xf32> to vector<1x4x16xf32>
    tpu.vector_store %arg7[%c1_202, %c0_203, %c240_204], %326 {strides = array<i32>} : memref<2x4x256xf32, #tpu.memory_space<vmem>>, vector<1x4x16xf32>,
    return
  }
  func.func @transform_0(%arg0: i32) -> (i32, i32, i32) {
    %c0_i32 = arith.constant 0 : i32
    %c0_i32_0 = arith.constant 0 : i32
    %c0_i32_1 = arith.constant 0 : i32
    return %arg0, %c0_i32, %c0_i32_0 : i32, i32, i32
  }
  func.func @transform_1(%arg0: i32) -> (i32, i32) {
    %c0_i32 = arith.constant 0 : i32
    %c0_i32_0 = arith.constant 0 : i32
    %c0_i32_1 = arith.constant 0 : i32
    return %c0_i32, %c0_i32_0 : i32, i32
  }
  func.func @transform_2(%arg0: i32) -> (i32, i32) {
    %c0_i32 = arith.constant 0 : i32
    %c0_i32_0 = arith.constant 0 : i32
    %c0_i32_1 = arith.constant 0 : i32
    return %c0_i32, %c0_i32_0 : i32, i32
  }
  func.func @transform_3(%arg0: i32) -> (i32, i32) {
    %c0_i32 = arith.constant 0 : i32
    %c0_i32_0 = arith.constant 0 : i32
    %c0_i32_1 = arith.constant 0 : i32
    return %c0_i32, %c0_i32_0 : i32, i32
  }
  func.func @transform_4(%arg0: i32) -> (i32, i32) {
    %c0_i32 = arith.constant 0 : i32
    %c0_i32_0 = arith.constant 0 : i32
    %c0_i32_1 = arith.constant 0 : i32
    return %c0_i32, %c0_i32_0 : i32, i32
  }
  func.func @transform_5(%arg0: i32) -> (i32, i32) {
    %c0_i32 = arith.constant 0 : i32
    %c0_i32_0 = arith.constant 0 : i32
    %c0_i32_1 = arith.constant 0 : i32
    return %c0_i32, %c0_i32_0 : i32, i32
  }
  func.func @transform_6(%arg0: i32) -> (i32, i32, i32) {
    %c0_i32 = arith.constant 0 : i32
    %c0_i32_0 = arith.constant 0 : i32
    %c0_i32_1 = arith.constant 0 : i32
    return %arg0, %c0_i32, %c0_i32_0 : i32, i32, i32
  }
}

</mosaic_0001>

<llo_original>
// kernel: residual_block.1
$region0: #{residual_block.1}
  #allocation0 [shape = 'u32[]', space=smem, size = 0x4, offset = 0x4, fixed_abs, tag = 'smem constant byte address 0x4 - core index']
  #allocation1 [shape = 'u32[144,128]{1,0:T(1,128)}', space=vmem, size = 0x12000, scoped, tag = 'internal scratch']
  #allocation2 [shape = 'bf16[4,904]{1,0:T(4,128)(2,1)}', space=vmem, size = 0x2000, scoped, tag = 'scratch operand']
  #allocation3 [shape = 'bf16[36,648]{1,0:T(8,128)(2,1)}', space=vmem, size = 0xf000, scoped, tag = 'scratch operand']
  %s0 = inlined_call_operand.vmem [shape: f32[2,4,256], index: 0, kind: input, shape index: {}]
  %s1 = inlined_call_operand.vmem [shape: bf16[4,36], index: 1, kind: input, shape index: {}]
  %s2 = inlined_call_operand.vmem [shape: f32[4,1], index: 2, kind: input, shape index: {}]
  %s3 = inlined_call_operand.vmem [shape: bf16[4,36], index: 3, kind: input, shape index: {}]
  %s4 = inlined_call_operand.vmem [shape: f32[4,1], index: 4, kind: input, shape index: {}]
  %s5 = inlined_call_operand.vmem [shape: f32[1,648], index: 5, kind: input, shape index: {}]
  %s6 = inlined_call_operand.vmem [shape: f32[2,4,256], index: 6, kind: output, shape index: {}]
  %s7 = sld [smem:[#allocation0]]
  $region34: #{residual_block.1} parent=0
    _
  %s9 = ssub.s32 1, %s7
  %s10 = scalar_select 0, %s9, %s7
  // Predicated region
  $region2: #{residual_block.1} parent=0 // pred_check
    _
  $region3: #{residual_block.1} parent=0 // pred_check_branch
    %12 = sbr.rel (0) target = $region5
  $region4: #{residual_block.1} parent=0 // pred_region
    _
  $region5: #{residual_block.1} parent=0 // pred_fallthru
    _
  // Predicated region
  $region6: #{residual_block.1} parent=0 // pred_check
    _
  $region7: #{residual_block.1} parent=0 // pred_check_branch
    %14 = sbr.rel (0) target = $region9
  $region8: #{residual_block.1} parent=0 // pred_region
    _
  $region9: #{residual_block.1} parent=0 // pred_fallthru
    _
  // Predicated region
  $region10: #{residual_block.1} parent=0 // pred_check
    _
  $region11: #{residual_block.1} parent=0 // pred_check_branch
    %16 = sbr.rel (0) target = $region13
  $region12: #{residual_block.1} parent=0 // pred_region
    _
  $region13: #{residual_block.1} parent=0 // pred_fallthru
    _
  // Predicated region
  $region14: #{residual_block.1} parent=0 // pred_check
    _
  $region15: #{residual_block.1} parent=0 // pred_check_branch
    %18 = sbr.rel (0) target = $region17
  $region16: #{residual_block.1} parent=0 // pred_region
    _
  $region17: #{residual_block.1} parent=0 // pred_fallthru
    _
  // Predicated region
  $region18: #{residual_block.1} parent=0 // pred_check
    _
  $region19: #{residual_block.1} parent=0 // pred_check_branch
    %20 = sbr.rel (0) target = $region21
  $region20: #{residual_block.1} parent=0 // pred_region
    _
  $region21: #{residual_block.1} parent=0 // pred_fallthru
    _
  // Predicated region
  $region22: #{residual_block.1} parent=0 // pred_check
    _
  $region23: #{residual_block.1} parent=0 // pred_check_branch
    %22 = sbr.rel (0) target = $region25
  $region24: #{residual_block.1} parent=0 // pred_region
    _
  $region25: #{residual_block.1} parent=0 // pred_fallthru
    _
  %24 = vst [vmem:[#allocation2] sm:$0xff] 0
  %vm25 = vcmask 1041408
  %vm26 = vcmask 1043458
  %vm27 = vmor %vm26, %vm25
  %vm28 = vcmask 1045508
  %vm29 = vmor %vm28, %vm27
  %vm30 = vcmask 64518
  %vm31 = vmor %vm30, %vm29
  %32 = vst.msk [vmem:[#allocation2 + $0x8] sm:$0xff] %vm31, 0
  %v33 = vld [vmem:[%s0] sm:$0xff]
  %v34 = vmax.f32 %v33, 0.0
  %v36 = vcombine.high %v34, %v34
  %v38 = vpack.c.bf16 %v34, %v34
  %v39 = vpack.c.bf16 %v36, %v36
  %v42 = vunpack.c.l.s4 1983009808
  %v43 = vunpack.c.0.s8 %v42
  %v44 = vlaneseq
  %v45 = vshrl.u32 %v44, 7
  %v46 = vsub.s32 %v43, %v45
  %v47 = vrot.slane %v38, %v46
  %48 = vrot.lane.b32.xlu0 %v47, 19
  %v49 = vpop.permute.xlu0 %48
  %vm51 = vcmask 279704
  %52 = vst.msk [vmem:[#allocation2 + $0x2] sm:$0x3] %vm51, %v49
  %53 = vrot.lane.b32.xlu0 %v47, 21
  %v54 = vpop.permute.xlu0 %53
  %vm56 = vcmask 427304
  %57 = vst.msk [vmem:[#allocation2 + $0x2] sm:$0x3] %vm56, %v54
  %58 = vrot.lane.b32.xlu0 %v47, 23
  %v59 = vpop.permute.xlu0 %58
  %vm61 = vcmask 574904
  %62 = vst.msk [vmem:[#allocation2 + $0x2] sm:$0x3] %vm61, %v59
  %63 = vrot.lane.b32.xlu0 %v47, 25
  %v64 = vpop.permute.xlu0 %63
  %vm66 = vcmask 722504
  %67 = vst.msk [vmem:[#allocation2 + $0x2] sm:$0x3] %vm66, %v64
  %68 = vrot.lane.b32.xlu0 %v47, 27
  %v69 = vpop.permute.xlu0 %68
  %vm71 = vcmask 870104
  %72 = vst.msk [vmem:[#allocation2 + $0x2] sm:$0x3] %vm71, %v69
  %73 = vrot.lane.b32.xlu0 %v47, 29
  %v74 = vpop.permute.xlu0 %73
  %vm76 = vcmask 1017704
  %77 = vst.msk [vmem:[#allocation2 + $0x2] sm:$0x3] %vm76, %v74
  %78 = vrot.lane.b32.xlu0 %v47, 31
  %v79 = vpop.permute.xlu0 %78
  %v80 = vrot.slane %v79, 6
  %vm81 = vcmask 252928
  %v82 = vsel %vm81, %v80, %v79
  %vm84 = vcmask 1042424
  %vm85 = vcmask 117762
  %vm86 = vmor %vm85, %vm84
  %87 = vst.msk [vmem:[#allocation2 + $0x2] sm:$0xf] %vm86, %v82
  %88 = vrot.lane.b32.xlu0 %v47, 33
  %v89 = vpop.permute.xlu0 %88
  %vm91 = vcmask 263304
  %92 = vst.msk [vmem:[#allocation2 + $0x4] sm:$0x3] %vm91, %v89
  %v95 = vunpack.c.l.s4 1983009808
  %v96 = vunpack.c.0.s8 %v95
  %v97 = vlaneseq
  %v98 = vshrl.u32 %v97, 7
  %v99 = vsub.s32 %v96, %v98
  %v100 = vrot.slane %v39, %v99
  %101 = vrot.lane.b32.xlu0 %v100, 35
  %v102 = vpop.permute.xlu0 %101
  %vm104 = vcmask 410904
  %105 = vst.msk [vmem:[#allocation2 + $0x4] sm:$0x3] %vm104, %v102
  %106 = vrot.lane.b32.xlu0 %v100, 37
  %v107 = vpop.permute.xlu0 %106
  %vm109 = vcmask 558504
  %110 = vst.msk [vmem:[#allocation2 + $0x4] sm:$0x3] %vm109, %v107
  %111 = vrot.lane.b32.xlu0 %v100, 39
  %v112 = vpop.permute.xlu0 %111
  %vm114 = vcmask 706104
  %115 = vst.msk [vmem:[#allocation2 + $0x4] sm:$0x3] %vm114, %v112
  %116 = vrot.lane.b32.xlu0 %v100, 41
  %v117 = vpop.permute.xlu0 %116
  %vm119 = vcmask 853704
  %120 = vst.msk [vmem:[#allocation2 + $0x4] sm:$0x3] %vm119, %v117
  %121 = vrot.lane.b32.xlu0 %v100, 43
  %v122 = vpop.permute.xlu0 %121
  %vm124 = vcmask 1001304
  %125 = vst.msk [vmem:[#allocation2 + $0x4] sm:$0x3] %vm124, %v122
  %126 = vrot.lane.b32.xlu0 %v100, 45
  %v127 = vpop.permute.xlu0 %126
  %v128 = vrot.slane %v127, 6
  %vm129 = vcmask 367616
  %v130 = vsel %vm129, %v128, %v127
  %vm132 = vcmask 1042408
  %vm133 = vcmask 101378
  %vm134 = vmor %vm133, %vm132
  %135 = vst.msk [vmem:[#allocation2 + $0x4] sm:$0xf] %vm134, %v130
  %136 = vrot.lane.b32.xlu0 %v100, 47
  %v137 = vpop.permute.xlu0 %136
  %vm139 = vcmask 246904
  %140 = vst.msk [vmem:[#allocation2 + $0x6] sm:$0x3] %vm139, %v137
  %141 = vrot.lane.b32.xlu0 %v100, 49
  %v142 = vpop.permute.xlu0 %141
  %vm144 = vcmask 394504
  %145 = vst.msk [vmem:[#allocation2 + $0x6] sm:$0x3] %vm144, %v142
  %s146 = scalar_lea.vmem %s0, 8
  %v147 = vld [vmem:[%s146] sm:$0xff]
  %v148 = vmax.f32 %v147, 0.0
  %v150 = vcombine.high %v148, %v148
  %v152 = vpack.c.bf16 %v148, %v148
  %v153 = vpack.c.bf16 %v150, %v150
  %v156 = vunpack.c.l.s4 1983009808
  %v157 = vunpack.c.0.s8 %v156
  %v158 = vlaneseq
  %v159 = vshrl.u32 %v158, 7
  %v160 = vsub.s32 %v157, %v159
  %v161 = vrot.slane %v152, %v160
  %162 = vrot.lane.b32.xlu0 %v161, 87
  %v163 = vpop.permute.xlu0 %162
  %vm165 = vcmask 837304
  %166 = vst.msk [vmem:[#allocation2 + $0x6] sm:$0x3] %vm165, %v163
  %167 = vrot.lane.b32.xlu0 %v161, 89
  %v168 = vpop.permute.xlu0 %167
  %vm170 = vcmask 984904
  %171 = vst.msk [vmem:[#allocation2 + $0x6] sm:$0x3] %vm170, %v168
  %172 = vrot.lane.b32.xlu0 %v161, 91
  %v173 = vpop.permute.xlu0 %172
  %v174 = vrot.slane %v173, 6
  %vm175 = vcmask 744448
  %v176 = vsel %vm175, %v174, %v173
  %vm178 = vcmask 1042392
  %vm179 = vcmask 84994
  %vm180 = vmor %vm179, %vm178
  %181 = vst.msk [vmem:[#allocation2 + $0x6] sm:$0xf] %vm180, %v176
  %182 = vrot.lane.b32.xlu0 %v161, 93
  %v183 = vpop.permute.xlu0 %182
  %vm185 = vcmask 230504
  %186 = vst.msk [vmem:[#allocation2 + $0x8] sm:$0x3] %vm185, %v183
  %187 = vrot.lane.b32.xlu0 %v161, 95
  %v188 = vpop.permute.xlu0 %187
  %vm190 = vcmask 378104
  %191 = vst.msk [vmem:[#allocation2 + $0x8] sm:$0x3] %vm190, %v188
  %192 = vrot.lane.b32.xlu0 %v161, 97
  %v193 = vpop.permute.xlu0 %192
  %vm195 = vcmask 525704
  %196 = vst.msk [vmem:[#allocation2 + $0x8] sm:$0x3] %vm195, %v193
  %197 = vrot.lane.b32.xlu0 %v161, 99
  %v198 = vpop.permute.xlu0 %197
  %vm200 = vcmask 673304
  %201 = vst.msk [vmem:[#allocation2 + $0x8] sm:$0x3] %vm200, %v198
  %202 = vrot.lane.b32.xlu0 %v161, 101
  %v203 = vpop.permute.xlu0 %202
  %vm205 = vcmask 820904
  %206 = vst.msk [vmem:[#allocation2 + $0x8] sm:$0x3] %vm205, %v203
  %v209 = vunpack.c.l.s4 1983009808
  %v210 = vunpack.c.0.s8 %v209
  %v211 = vlaneseq
  %v212 = vshrl.u32 %v211, 7
  %v213 = vsub.s32 %v210, %v212
  %v214 = vrot.slane %v153, %v213
  %215 = vrot.lane.b32.xlu0 %v214, 103
  %v216 = vpop.permute.xlu0 %215
  %vm218 = vcmask 968504
  %219 = vst.msk [vmem:[#allocation2 + $0x8] sm:$0x3] %vm218, %v216
  %220 = vrot.lane.b32.xlu0 %v214, 105
  %v221 = vpop.permute.xlu0 %220
  %v222 = vrot.slane %v221, 6
  %vm223 = vcmask 859136
  %v224 = vsel %vm223, %v222, %v221
  %vm226 = vcmask 1042376
  %vm227 = vcmask 68610
  %vm228 = vmor %vm227, %vm226
  %229 = vst.msk [vmem:[#allocation2 + $0x8] sm:$0xf] %vm228, %v224
  %230 = vrot.lane.b32.xlu0 %v214, 107
  %v231 = vpop.permute.xlu0 %230
  %vm233 = vcmask 214104
  %234 = vst.msk [vmem:[#allocation2 + $0xa] sm:$0x3] %vm233, %v231
  %235 = vrot.lane.b32.xlu0 %v214, 109
  %v236 = vpop.permute.xlu0 %235
  %vm238 = vcmask 361704
  %239 = vst.msk [vmem:[#allocation2 + $0xa] sm:$0x3] %vm238, %v236
  %240 = vrot.lane.b32.xlu0 %v214, 111
  %v241 = vpop.permute.xlu0 %240
  %vm243 = vcmask 509304
  %244 = vst.msk [vmem:[#allocation2 + $0xa] sm:$0x3] %vm243, %v241
  %245 = vrot.lane.b32.xlu0 %v214, 113
  %v246 = vpop.permute.xlu0 %245
  %vm248 = vcmask 656904
  %249 = vst.msk [vmem:[#allocation2 + $0xa] sm:$0x3] %vm248, %v246
  %250 = vrot.lane.b32.xlu0 %v214, 115
  %v251 = vpop.permute.xlu0 %250
  %vm253 = vcmask 804504
  %254 = vst.msk [vmem:[#allocation2 + $0xa] sm:$0x3] %vm253, %v251
  %255 = vrot.lane.b32.xlu0 %v214, 117
  %v256 = vpop.permute.xlu0 %255
  %vm258 = vcmask 952104
  %259 = vst.msk [vmem:[#allocation2 + $0xa] sm:$0x3] %vm258, %v256
  %v260 = vld [vmem:[#allocation2] sm:$0xff]
  %v261 = vld [vmem:[#allocation2 + $0x8] sm:$0xf]
  %v264 = vcombine.high %v260, %v260
  %v266 = vunpack.c.l.s4 1983009808
  %v267 = vunpack.c.0.s8 %v266
  %v268 = vlaneseq
  %v269 = vshrl.u32 %v268, 7
  %v270 = vsub.s32 %v267, %v269
  %v271 = vrot.slane %v260, %v270
  %v273 = vunpack.c.l.s4 1983009808
  %v274 = vunpack.c.0.s8 %v273
  %v275 = vlaneseq
  %v276 = vshrl.u32 %v275, 7
  %v277 = vsub.s32 %v274, %v276
  %v278 = vrot.slane %v264, %v277
  %v280 = vunpack.c.l.s4 1983009808
  %v281 = vunpack.c.0.s8 %v280
  %v282 = vlaneseq
  %v283 = vshrl.u32 %v282, 7
  %v284 = vsub.s32 %v281, %v283
  %v285 = vrot.slane %v261, %v284
  %286 = vrot.lane.b32.xlu0 %v271, 19
  %v287 = vpop.permute.xlu0 %286
  %288 = vrot.lane.b32.xlu0 %v278, 19
  %v289 = vpop.permute.xlu0 %288
  %290 = vrot.lane.b32.xlu0 %v285, 19
  %v291 = vpop.permute.xlu0 %290
  %v292 = vrot.slane %v287, 4
  %v293 = vrot.slane %v289, 4
  %v294 = vrot.slane %v291, 4
  %vm295 = vcmask 1043456
  %v296 = vsel %vm295, %v292, %v293
  %vm297 = vcmask 154624
  %v298 = vsel %vm297, %v287, %v296
  %v299 = vsel %vm295, %v293, %v294
  %v300 = vsel %vm297, %v289, %v299
  %v301 = vsel %vm297, %v291, %v294
  %305 = vst [vmem:[#allocation3] sm:$0x33] %v298
  %306 = vst [vmem:[#allocation3 + $0x8] sm:$0x33] %v300
  %vm307 = vcmask 62468
  %vm308 = vmor %vm307, %vm25
  %309 = vst.msk [vmem:[#allocation3 + $0x10] sm:$0x33] %vm308, %v301
  %v310 = vld [vmem:[#allocation2] sm:$0xff]
  %v311 = vld [vmem:[#allocation2 + $0x8] sm:$0xf]
  %v314 = vcombine.low %v310, %v310
  %v316 = vunpack.c.l.s4 1983009808
  %v317 = vunpack.c.0.s8 %v316
  %v318 = vlaneseq
  %v319 = vshrl.u32 %v318, 7
  %v320 = vsub.s32 %v317, %v319
  %v321 = vrot.slane %v314, %v320
  %v323 = vunpack.c.l.s4 1983009808
  %v324 = vunpack.c.0.s8 %v323
  %v325 = vlaneseq
  %v326 = vshrl.u32 %v325, 7
  %v327 = vsub.s32 %v324, %v326
  %v328 = vrot.slane %v310, %v327
  %v329 = vcombine.low %v311, %v311
  %v331 = vunpack.c.l.s4 1983009808
  %v332 = vunpack.c.0.s8 %v331
  %v333 = vlaneseq
  %v334 = vshrl.u32 %v333, 7
  %v335 = vsub.s32 %v332, %v334
  %v336 = vrot.slane %v329, %v335
  %337 = vrot.lane.b32.xlu0 %v321, 18
  %v338 = vpop.permute.xlu0 %337
  %339 = vrot.lane.b32.xlu0 %v328, 18
  %v340 = vpop.permute.xlu0 %339
  %341 = vrot.lane.b32.xlu0 %v336, 18
  %v342 = vpop.permute.xlu0 %341
  %v343 = vrot.slane %v338, 4
  %v344 = vrot.slane %v340, 4
  %v345 = vrot.slane %v342, 4
  %v346 = vsel %vm295, %v343, %v344
  %vm347 = vcmask 146432
  %v348 = vsel %vm347, %v338, %v346
  %v349 = vsel %vm295, %v344, %v345
  %v350 = vsel %vm347, %v340, %v349
  %v351 = vsel %vm347, %v342, %v345
  %355 = vst [vmem:[#allocation3] sm:$0xcc] %v348
  %356 = vst [vmem:[#allocation3 + $0x8] sm:$0xcc] %v350
  %vm357 = vmor %vm30, %vm26
  %358 = vst.msk [vmem:[#allocation3 + $0x10] sm:$0xcc] %vm357, %v351
  %v359 = vld [vmem:[#allocation2] sm:$0xff]
  %v360 = vld [vmem:[#allocation2 + $0x8] sm:$0xf]
  %v363 = vcombine.high %v359, %v359
  %v365 = vunpack.c.l.s4 1983009808
  %v366 = vunpack.c.0.s8 %v365
  %v367 = vlaneseq
  %v368 = vshrl.u32 %v367, 7
  %v369 = vsub.s32 %v366, %v368
  %v370 = vrot.slane %v359, %v369
  %v372 = vunpack.c.l.s4 1983009808
  %v373 = vunpack.c.0.s8 %v372
  %v374 = vlaneseq
  %v375 = vshrl.u32 %v374, 7
  %v376 = vsub.s32 %v373, %v375
  %v377 = vrot.slane %v363, %v376
  %v379 = vunpack.c.l.s4 1983009808
  %v380 = vunpack.c.0.s8 %v379
  %v381 = vlaneseq
  %v382 = vshrl.u32 %v381, 7
  %v383 = vsub.s32 %v380, %v382
  %v384 = vrot.slane %v360, %v383
  %385 = vrot.lane.b32.xlu0 %v370, 17
  %v386 = vpop.permute.xlu0 %385
  %387 = vrot.lane.b32.xlu0 %v377, 17
  %v388 = vpop.permute.xlu0 %387
  %389 = vrot.lane.b32.xlu0 %v384, 17
  %v390 = vpop.permute.xlu0 %389
  %v391 = vrot.slane %v386, 4
  %v392 = vrot.slane %v388, 4
  %v393 = vrot.slane %v390, 4
  %v394 = vsel %vm295, %v391, %v392
  %vm395 = vcmask 138240
  %v396 = vsel %vm395, %v386, %v394
  %v397 = vsel %vm295, %v392, %v393
  %v398 = vsel %vm395, %v388, %v397
  %v399 = vsel %vm395, %v390, %v393
  %403 = vst [vmem:[#allocation3 + $0x18] sm:$0x33] %v396
  %404 = vst [vmem:[#allocation3 + $0x20] sm:$0x33] %v398
  %405 = vst.msk [vmem:[#allocation3 + $0x28] sm:$0x33] %vm308, %v399
  %v406 = vld [vmem:[#allocation2] sm:$0xff]
  %v407 = vld [vmem:[#allocation2 + $0x8] sm:$0x3f]
  %v410 = vcombine.low %v406, %v406
  %v412 = vunpack.c.l.s4 1983009808
  %v413 = vunpack.c.0.s8 %v412
  %v414 = vlaneseq
  %v415 = vshrl.u32 %v414, 7
  %v416 = vsub.s32 %v413, %v415
  %v417 = vrot.slane %v410, %v416
  %v419 = vunpack.c.l.s4 1983009808
  %v420 = vunpack.c.0.s8 %v419
  %v421 = vlaneseq
  %v422 = vshrl.u32 %v421, 7
  %v423 = vsub.s32 %v420, %v422
  %v424 = vrot.slane %v406, %v423
  %v425 = vcombine.low %v407, %v407
  %v427 = vunpack.c.l.s4 1983009808
  %v428 = vunpack.c.0.s8 %v427
  %v429 = vlaneseq
  %v430 = vshrl.u32 %v429, 7
  %v431 = vsub.s32 %v428, %v430
  %v432 = vrot.slane %v425, %v431
  %v434 = vunpack.c.l.s4 1983009808
  %v435 = vunpack.c.0.s8 %v434
  %v436 = vlaneseq
  %v437 = vshrl.u32 %v436, 7
  %v438 = vsub.s32 %v435, %v437
  %v439 = vrot.slane %v407, %v438
  %440 = vrot.lane.b32.xlu0 %v417, 1
  %v441 = vpop.permute.xlu0 %440
  %442 = vrot.lane.b32.xlu0 %v424, 1
  %v443 = vpop.permute.xlu0 %442
  %444 = vrot.lane.b32.xlu0 %v432, 1
  %v445 = vpop.permute.xlu0 %444
  %446 = vrot.lane.b32.xlu0 %v439, 1
  %v447 = vpop.permute.xlu0 %446
  %v448 = vrot.slane %v441, 4
  %v449 = vrot.slane %v443, 4
  %v450 = vrot.slane %v445, 4
  %v451 = vrot.slane %v447, 4
  %v452 = vsel %vm295, %v448, %v449
  %vm453 = vcmask 7168
  %v454 = vsel %vm453, %v441, %v452
  %v455 = vsel %vm295, %v449, %v450
  %v456 = vsel %vm453, %v443, %v455
  %v457 = vsel %vm295, %v450, %v451
  %v458 = vsel %vm453, %v445, %v457
  %462 = vst [vmem:[#allocation3 + $0x18] sm:$0xcc] %v454
  %463 = vst [vmem:[#allocation3 + $0x20] sm:$0xcc] %v456
  %464 = vst.msk [vmem:[#allocation3 + $0x28] sm:$0xcc] %vm357, %v458
  %v465 = vld [vmem:[#allocation2 + $0x2] sm:$0xff]
  %v466 = vld [vmem:[#allocation2 + $0xa] sm:$0xf]
  %v469 = vcombine.high %v465, %v465
  %v471 = vunpack.c.l.s4 1983009808
  %v472 = vunpack.c.0.s8 %v471
  %v473 = vlaneseq
  %v474 = vshrl.u32 %v473, 7
  %v475 = vsub.s32 %v472, %v474
  %v476 = vrot.slane %v465, %v475
  %v478 = vunpack.c.l.s4 1983009808
  %v479 = vunpack.c.0.s8 %v478
  %v480 = vlaneseq
  %v481 = vshrl.u32 %v480, 7
  %v482 = vsub.s32 %v479, %v481
  %v483 = vrot.slane %v469, %v482
  %v485 = vunpack.c.l.s4 1983009808
  %v486 = vunpack.c.0.s8 %v485
  %v487 = vlaneseq
  %v488 = vshrl.u32 %v487, 7
  %v489 = vsub.s32 %v486, %v488
  %v490 = vrot.slane %v466, %v489
  %494 = vst [vmem:[#allocation3 + $0x30] sm:$0x33] %v476
  %495 = vst [vmem:[#allocation3 + $0x38] sm:$0x33] %v483
  %496 = vst.msk [vmem:[#allocation3 + $0x40] sm:$0x33] %vm308, %v490
  %v497 = vld [vmem:[#allocation2 + $0x2] sm:$0xff]
  %v498 = vld [vmem:[#allocation2 + $0xa] sm:$0xf]
  %v501 = vcombine.low %v497, %v497
  %v503 = vunpack.c.l.s4 1983009808
  %v504 = vunpack.c.0.s8 %v503
  %v505 = vlaneseq
  %v506 = vshrl.u32 %v505, 7
  %v507 = vsub.s32 %v504, %v506
  %v508 = vrot.slane %v501, %v507
  %v510 = vunpack.c.l.s4 1983009808
  %v511 = vunpack.c.0.s8 %v510
  %v512 = vlaneseq
  %v513 = vshrl.u32 %v512, 7
  %v514 = vsub.s32 %v511, %v513
  %v515 = vrot.slane %v497, %v514
  %v516 = vcombine.low %v498, %v498
  %v518 = vunpack.c.l.s4 1983009808
  %v519 = vunpack.c.0.s8 %v518
  %v520 = vlaneseq
  %v521 = vshrl.u32 %v520, 7
  %v522 = vsub.s32 %v519, %v521
  %v523 = vrot.slane %v516, %v522
  %524 = vrot.lane.b32.xlu0 %v508, 127
  %v525 = vpop.permute.xlu0 %524
  %526 = vrot.lane.b32.xlu0 %v515, 127
  %v527 = vpop.permute.xlu0 %526
  %528 = vrot.lane.b32.xlu0 %v523, 127
  %v529 = vpop.permute.xlu0 %528
  %v530 = vrot.slane %v525, 4
  %v531 = vrot.slane %v527, 4
  %v532 = vrot.slane %v529, 4
  %v533 = vsel %vm295, %v530, %v531
  %vm534 = vcmask 1039360
  %v535 = vsel %vm534, %v525, %v533
  %v536 = vsel %vm295, %v531, %v532
  %v537 = vsel %vm534, %v527, %v536
  %v538 = vsel %vm534, %v529, %v532
  %542 = vst [vmem:[#allocation3 + $0x30] sm:$0xcc] %v535
  %543 = vst [vmem:[#allocation3 + $0x38] sm:$0xcc] %v537
  %544 = vst.msk [vmem:[#allocation3 + $0x40] sm:$0xcc] %vm357, %v538
  %v545 = vld [vmem:[#allocation2 + $0x2] sm:$0xff]
  %v546 = vld [vmem:[#allocation2 + $0xa] sm:$0xf]
  %v549 = vcombine.high %v545, %v545
  %v551 = vunpack.c.l.s4 1983009808
  %v552 = vunpack.c.0.s8 %v551
  %v553 = vlaneseq
  %v554 = vshrl.u32 %v553, 7
  %v555 = vsub.s32 %v552, %v554
  %v556 = vrot.slane %v545, %v555
  %v558 = vunpack.c.l.s4 1983009808
  %v559 = vunpack.c.0.s8 %v558
  %v560 = vlaneseq
  %v561 = vshrl.u32 %v560, 7
  %v562 = vsub.s32 %v559, %v561
  %v563 = vrot.slane %v549, %v562
  %v565 = vunpack.c.l.s4 1983009808
  %v566 = vunpack.c.0.s8 %v565
  %v567 = vlaneseq
  %v568 = vshrl.u32 %v567, 7
  %v569 = vsub.s32 %v566, %v568
  %v570 = vrot.slane %v546, %v569
  %571 = vrot.lane.b32.xlu0 %v556, 111
  %v572 = vpop.permute.xlu0 %571
  %573 = vrot.lane.b32.xlu0 %v563, 111
  %v574 = vpop.permute.xlu0 %573
  %575 = vrot.lane.b32.xlu0 %v570, 111
  %v576 = vpop.permute.xlu0 %575
  %v577 = vrot.slane %v572, 4
  %v578 = vrot.slane %v574, 4
  %v579 = vrot.slane %v576, 4
  %v580 = vsel %vm295, %v577, %v578
  %vm581 = vcmask 908288
  %v582 = vsel %vm581, %v572, %v580
  %v583 = vsel %vm295, %v578, %v579
  %v584 = vsel %vm581, %v574, %v583
  %v585 = vsel %vm581, %v576, %v579
  %589 = vst [vmem:[#allocation3 + $0x48] sm:$0x33] %v582
  %590 = vst [vmem:[#allocation3 + $0x50] sm:$0x33] %v584
  %591 = vst.msk [vmem:[#allocation3 + $0x58] sm:$0x33] %vm308, %v585
  %v592 = vld [vmem:[#allocation2 + $0x2] sm:$0xff]
  %v593 = vld [vmem:[#allocation2 + $0xa] sm:$0xf]
  %v596 = vcombine.low %v592, %v592
  %v598 = vunpack.c.l.s4 1983009808
  %v599 = vunpack.c.0.s8 %v598
  %v600 = vlaneseq
  %v601 = vshrl.u32 %v600, 7
  %v602 = vsub.s32 %v599, %v601
  %v603 = vrot.slane %v596, %v602
  %v605 = vunpack.c.l.s4 1983009808
  %v606 = vunpack.c.0.s8 %v605
  %v607 = vlaneseq
  %v608 = vshrl.u32 %v607, 7
  %v609 = vsub.s32 %v606, %v608
  %v610 = vrot.slane %v592, %v609
  %v611 = vcombine.low %v593, %v593
  %v613 = vunpack.c.l.s4 1983009808
  %v614 = vunpack.c.0.s8 %v613
  %v615 = vlaneseq
  %v616 = vshrl.u32 %v615, 7
  %v617 = vsub.s32 %v614, %v616
  %v618 = vrot.slane %v611, %v617
  %619 = vrot.lane.b32.xlu0 %v603, 110
  %v620 = vpop.permute.xlu0 %619
  %621 = vrot.lane.b32.xlu0 %v610, 110
  %v622 = vpop.permute.xlu0 %621
  %623 = vrot.lane.b32.xlu0 %v618, 110
  %v624 = vpop.permute.xlu0 %623
  %v625 = vrot.slane %v620, 4
  %v626 = vrot.slane %v622, 4
  %v627 = vrot.slane %v624, 4
  %v628 = vsel %vm295, %v625, %v626
  %vm629 = vcmask 900096
  %v630 = vsel %vm629, %v620, %v628
  %v631 = vsel %vm295, %v626, %v627
  %v632 = vsel %vm629, %v622, %v631
  %v633 = vsel %vm629, %v624, %v627
  %637 = vst [vmem:[#allocation3 + $0x48] sm:$0xcc] %v630
  %638 = vst [vmem:[#allocation3 + $0x50] sm:$0xcc] %v632
  %639 = vst.msk [vmem:[#allocation3 + $0x58] sm:$0xcc] %vm357, %v633
  %v640 = vld [vmem:[#allocation2 + $0x2] sm:$0xff]
  %v641 = vld [vmem:[#allocation2 + $0xa] sm:$0xf]
  %v644 = vcombine.high %v640, %v640
  %v646 = vunpack.c.l.s4 1983009808
  %v647 = vunpack.c.0.s8 %v646
  %v648 = vlaneseq
  %v649 = vshrl.u32 %v648, 7
  %v650 = vsub.s32 %v647, %v649
  %v651 = vrot.slane %v640, %v650
  %v653 = vunpack.c.l.s4 1983009808
  %v654 = vunpack.c.0.s8 %v653
  %v655 = vlaneseq
  %v656 = vshrl.u32 %v655, 7
  %v657 = vsub.s32 %v654, %v656
  %v658 = vrot.slane %v644, %v657
  %v660 = vunpack.c.l.s4 1983009808
  %v661 = vunpack.c.0.s8 %v660
  %v662 = vlaneseq
  %v663 = vshrl.u32 %v662, 7
  %v664 = vsub.s32 %v661, %v663
  %v665 = vrot.slane %v641, %v664
  %666 = vrot.lane.b32.xlu0 %v651, 109
  %v667 = vpop.permute.xlu0 %666
  %668 = vrot.lane.b32.xlu0 %v658, 109
  %v669 = vpop.permute.xlu0 %668
  %670 = vrot.lane.b32.xlu0 %v665, 109
  %v671 = vpop.permute.xlu0 %670
  %v672 = vrot.slane %v667, 4
  %v673 = vrot.slane %v669, 4
  %v674 = vrot.slane %v671, 4
  %v675 = vsel %vm295, %v672, %v673
  %vm676 = vcmask 891904
  %v677 = vsel %vm676, %v667, %v675
  %v678 = vsel %vm295, %v673, %v674
  %v679 = vsel %vm676, %v669, %v678
  %v680 = vsel %vm676, %v671, %v674
  %684 = vst [vmem:[#allocation3 + $0x60] sm:$0x33] %v677
  %685 = vst [vmem:[#allocation3 + $0x68] sm:$0x33] %v679
  %686 = vst.msk [vmem:[#allocation3 + $0x70] sm:$0x33] %vm308, %v680
  %v687 = vld [vmem:[%s1] sm:$0x3]
  %v688 = vld [vmem:[#allocation3] sm:$0xff]
  %v689 = vld [vmem:[#allocation3 + $0x8] sm:$0xff]
  %v690 = vld [vmem:[#allocation3 + $0x10] sm:$0xff]
  %v691 = vld [vmem:[#allocation3 + $0x18] sm:$0xff]
  %v692 = vld [vmem:[#allocation3 + $0x20] sm:$0xff]
  %v693 = vld [vmem:[#allocation3 + $0x28] sm:$0xff]
  %v694 = vld [vmem:[#allocation3 + $0x30] sm:$0xff]
  %v695 = vld [vmem:[#allocation3 + $0x38] sm:$0xff]
  %v696 = vld [vmem:[#allocation3 + $0x40] sm:$0xff]
  %v697 = vld [vmem:[#allocation3 + $0x48] sm:$0xff]
  %v698 = vld [vmem:[#allocation3 + $0x50] sm:$0xff]
  %v699 = vld [vmem:[#allocation3 + $0x58] sm:$0xff]
  %v700 = vld [vmem:[#allocation3 + $0x60] sm:$0x33]
  %v701 = vld [vmem:[#allocation3 + $0x68] sm:$0x33]
  %v702 = vld [vmem:[#allocation3 + $0x70] sm:$0x33]
  %v703 = vld [vmem:[%s2] sm:$0xf]
  %705 = vset.pattern.permute.xlu0 0
  %706 = vperm.xlu0 %705, %v703
  %v707 = vpop.permute.xlu0 %706
  %v724 = vunpack.c.l.b16 %v688
  %v725 = vunpack.c.h.b16 %v688
  %v726 = vunpack.c.l.b16 %v689
  %v727 = vunpack.c.h.b16 %v689
  %v728 = vunpack.c.l.b16 %v690
  %v729 = vunpack.c.h.b16 %v690
  %v730 = vunpack.c.l.b16 %v691
  %v731 = vunpack.c.h.b16 %v691
  %v732 = vunpack.c.l.b16 %v692
  %v733 = vunpack.c.h.b16 %v692
  %v734 = vunpack.c.l.b16 %v693
  %v735 = vunpack.c.h.b16 %v693
  %v736 = vunpack.c.l.b16 %v694
  %v737 = vunpack.c.h.b16 %v694
  %v738 = vunpack.c.l.b16 %v695
  %v739 = vunpack.c.h.b16 %v695
  %v740 = vunpack.c.l.b16 %v696
  %v741 = vunpack.c.h.b16 %v696
  %v742 = vunpack.c.l.b16 %v697
  %v743 = vunpack.c.h.b16 %v697
  %v744 = vunpack.c.l.b16 %v698
  %v745 = vunpack.c.h.b16 %v698
  %v746 = vunpack.c.l.b16 %v699
  %v747 = vunpack.c.h.b16 %v699
  %v748 = vunpack.c.l.b16 %v700
  %v749 = vunpack.c.h.b16 %v700
  %v750 = vunpack.c.l.b16 %v701
  %v751 = vunpack.c.h.b16 %v701
  %v752 = vunpack.c.l.b16 %v702
  %v753 = vunpack.c.h.b16 %v702
  %v754 = vpack.c.b16 %v730, %v724
  %v755 = vpack.c.b16 %v731, %v725
  %v756 = vpack.c.b16 %v732, %v726
  %v757 = vpack.c.b16 %v733, %v727
  %v758 = vpack.c.b16 %v734, %v728
  %v759 = vpack.c.b16 %v735, %v729
  %v760 = vpack.c.b16 %v742, %v736
  %v761 = vpack.c.b16 %v743, %v737
  %v762 = vpack.c.b16 %v744, %v738
  %v763 = vpack.c.b16 %v745, %v739
  %v764 = vpack.c.b16 %v746, %v740
  %v765 = vpack.c.b16 %v747, %v741
  %v766 = vpack.c.b16 %v748, %v748
  %v767 = vpack.c.b16 %v749, %v749
  %v768 = vpack.c.b16 %v750, %v750
  %v769 = vpack.c.b16 %v751, %v751
  %v770 = vpack.c.b16 %v752, %v752
  %v771 = vpack.c.b16 %v753, %v753
  %vm784 = vcmask 293888
  %v786 = vsel %vm784, %v687, 0
  %v789 = vsel %vm25, %v766, 0
  %v792 = vsel %vm25, %v767, 0
  %v795 = vsel %vm25, %v768, 0
  %v798 = vsel %vm25, %v769, 0
  %v801 = vsel %vm25, %v770, 0
  %v804 = vsel %vm25, %v771, 0
  %806 = vmatprep.subr.bf16.mxu0 %v755
  %807 = vmatpush1.bf16.msra.mxu0 %v754
  %808 = vmatprep.subr.bf16.mxu0 %v761
  %809 = vmatpush1.bf16.msra.mxu0 %v760
  %810 = vmatprep.subr.bf16.mxu0 %v792
  %811 = vmatpush1.bf16.msra.mxu0 %v789
  %812 = vmatprep.subr.bf16.mxu0 0
  %813 = vmatpush1.bf16.msra.mxu0 0
  %814 = vmatprep.subr.bf16.mxu0 0
  %815 = vmatpush1.bf16.msra.mxu0 0
  %816 = vmatprep.subr.bf16.mxu0 0
  %817 = vmatpush1.bf16.msra.mxu0 0
  %818 = vmatprep.subr.bf16.mxu0 0
  %819 = vmatpush1.bf16.msra.mxu0 0
  %820 = vmatprep.subr.bf16.mxu0 0
  %821 = vmatpush1.bf16.msra.mxu0 0
  %822 = vmatprep.subr.bf16.mxu0 0
  %823 = vmatpush1.bf16.msra.mxu0 0
  %824 = vmatprep.subr.bf16.mxu0 0
  %825 = vmatpush1.bf16.msra.mxu0 0
  %826 = vmatprep.subr.bf16.mxu0 0
  %827 = vmatpush1.bf16.msra.mxu0 0
  %828 = vmatprep.subr.bf16.mxu0 0
  %829 = vmatpush1.bf16.msra.mxu0 0
  %830 = vmatprep.subr.bf16.mxu0 0
  %831 = vmatpush1.bf16.msra.mxu0 0
  %832 = vmatprep.subr.bf16.mxu0 0
  %833 = vmatpush1.bf16.msra.mxu0 0
  %834 = vmatprep.subr.bf16.mxu0 0
  %835 = vmatpush1.bf16.msra.mxu0 0
  %836 = vmatprep.subr.bf16.mxu0 0
  %837 = vmatpush1.bf16.msra.mxu0 0
  %838 = vmatprep.mubr.bf16.mxu0 0
  %839 = vmatmul.mubr.bf16.gmra.mrb[0].mxu0 %v786
  %v840 = vpop.f32.mrb[0].mxu0
  %v841 = vadd.f32 %v707, %v840
  %v842 = vpop.f32.mrb[0].mxu0
  %v843 = vadd.f32 %v707, %v842
  %v844 = vpop.f32.mrb[0].mxu0
  %v845 = vpop.f32.mrb[0].mxu0
  %846 = vdwg.mxu0
  %847 = vmatprep.subr.bf16.mxu0 %v757
  %848 = vmatpush1.bf16.msra.mxu0 %v756
  %849 = vmatprep.subr.bf16.mxu0 %v763
  %850 = vmatpush1.bf16.msra.mxu0 %v762
  %851 = vmatprep.subr.bf16.mxu0 %v798
  %852 = vmatpush1.bf16.msra.mxu0 %v795
  %853 = vmatprep.subr.bf16.mxu0 0
  %854 = vmatpush1.bf16.msra.mxu0 0
  %855 = vmatprep.subr.bf16.mxu0 0
  %856 = vmatpush1.bf16.msra.mxu0 0
  %857 = vmatprep.subr.bf16.mxu0 0
  %858 = vmatpush1.bf16.msra.mxu0 0
  %859 = vmatprep.subr.bf16.mxu0 0
  %860 = vmatpush1.bf16.msra.mxu0 0
  %861 = vmatprep.subr.bf16.mxu0 0
  %862 = vmatpush1.bf16.msra.mxu0 0
  %863 = vmatprep.subr.bf16.mxu0 0
  %864 = vmatpush1.bf16.msra.mxu0 0
  %865 = vmatprep.subr.bf16.mxu0 0
  %866 = vmatpush1.bf16.msra.mxu0 0
  %867 = vmatprep.subr.bf16.mxu0 0
  %868 = vmatpush1.bf16.msra.mxu0 0
  %869 = vmatprep.subr.bf16.mxu0 0
  %870 = vmatpush1.bf16.msra.mxu0 0
  %871 = vmatprep.subr.bf16.mxu0 0
  %872 = vmatpush1.bf16.msra.mxu0 0
  %873 = vmatprep.subr.bf16.mxu0 0
  %874 = vmatpush1.bf16.msra.mxu0 0
  %875 = vmatprep.subr.bf16.mxu0 0
  %876 = vmatpush1.bf16.msra.mxu0 0
  %877 = vmatprep.subr.bf16.mxu0 0
  %878 = vmatpush1.bf16.msra.mxu0 0
  %879 = vmatprep.mubr.bf16.mxu0 0
  %880 = vmatmul.mubr.bf16.gmra.mrb[0].mxu0 %v786
  %v881 = vpop.f32.mrb[0].mxu0
  %v882 = vadd.f32 %v707, %v881
  %v883 = vpop.f32.mrb[0].mxu0
  %v884 = vadd.f32 %v707, %v883
  %v885 = vpop.f32.mrb[0].mxu0
  %v886 = vpop.f32.mrb[0].mxu0
  %887 = vdwg.mxu0
  %888 = vmatprep.subr.bf16.mxu0 %v759
  %889 = vmatpush1.bf16.msra.mxu0 %v758
  %890 = vmatprep.subr.bf16.mxu0 %v765
  %891 = vmatpush1.bf16.msra.mxu0 %v764
  %892 = vmatprep.subr.bf16.mxu0 %v804
  %893 = vmatpush1.bf16.msra.mxu0 %v801
  %894 = vmatprep.subr.bf16.mxu0 0
  %895 = vmatpush1.bf16.msra.mxu0 0
  %896 = vmatprep.subr.bf16.mxu0 0
  %897 = vmatpush1.bf16.msra.mxu0 0
  %898 = vmatprep.subr.bf16.mxu0 0
  %899 = vmatpush1.bf16.msra.mxu0 0
  %900 = vmatprep.subr.bf16.mxu0 0
  %901 = vmatpush1.bf16.msra.mxu0 0
  %902 = vmatprep.subr.bf16.mxu0 0
  %903 = vmatpush1.bf16.msra.mxu0 0
  %904 = vmatprep.subr.bf16.mxu0 0
  %905 = vmatpush1.bf16.msra.mxu0 0
  %906 = vmatprep.subr.bf16.mxu0 0
  %907 = vmatpush1.bf16.msra.mxu0 0
  %908 = vmatprep.subr.bf16.mxu0 0
  %909 = vmatpush1.bf16.msra.mxu0 0
  %910 = vmatprep.subr.bf16.mxu0 0
  %911 = vmatpush1.bf16.msra.mxu0 0
  %912 = vmatprep.subr.bf16.mxu0 0
  %913 = vmatpush1.bf16.msra.mxu0 0
  %914 = vmatprep.subr.bf16.mxu0 0
  %915 = vmatpush1.bf16.msra.mxu0 0
  %916 = vmatprep.subr.bf16.mxu0 0
  %917 = vmatpush1.bf16.msra.mxu0 0
  %918 = vmatprep.subr.bf16.mxu0 0
  %919 = vmatpush1.bf16.msra.mxu0 0
  %920 = vmatprep.mubr.bf16.mxu0 0
  %921 = vmatmul.mubr.bf16.gmra.mrb[0].mxu0 %v786
  %v922 = vpop.f32.mrb[0].mxu0
  %v923 = vadd.f32 %v707, %v922
  %v924 = vpop.f32.mrb[0].mxu0
  %v925 = vadd.f32 %v707, %v924
  %v926 = vpop.f32.mrb[0].mxu0
  %v927 = vpop.f32.mrb[0].mxu0
  %928 = vdwg.mxu0
  %v929 = vmax.f32 %v841, 0.0
  %v930 = vmax.f32 %v843, 0.0
  %v931 = vmax.f32 %v882, 0.0
  %v932 = vmax.f32 %v884, 0.0
  %v933 = vmax.f32 %v923, 0.0
  %v934 = vmax.f32 %v925, 0.0
  %v935 = vld [vmem:[%s5] sm:$0x3f]
  %v937 = vlaneseq
  %v938 = vshrl.u32 %v937, 7
  %v939 = vsub.s32 0, %v938
  %v940 = vrot.slane %v935, %v939
  %v941 = vlaneseq
  %v942 = vshrl.u32 %v941, 7
  %v943 = vsub.s32 1, %v942
  %v944 = vrot.slane %v935, %v943
  %v945 = vlaneseq
  %v946 = vshrl.u32 %v945, 7
  %v947 = vsub.s32 2, %v946
  %v948 = vrot.slane %v935, %v947
  %v949 = vlaneseq
  %v950 = vshrl.u32 %v949, 7
  %v951 = vsub.s32 3, %v950
  %v952 = vrot.slane %v935, %v951
  %v953 = vlaneseq
  %v954 = vshrl.u32 %v953, 7
  %v955 = vsub.s32 4, %v954
  %v956 = vrot.slane %v935, %v955
  %v957 = vlaneseq
  %v958 = vshrl.u32 %v957, 7
  %v959 = vsub.s32 5, %v958
  %v960 = vrot.slane %v935, %v959
  %v967 = vmul.f32 %v929, %v940
  %v968 = vmul.f32 %v930, %v944
  %v969 = vmul.f32 %v931, %v948
  %v970 = vmul.f32 %v932, %v952
  %v971 = vmul.f32 %v933, %v956
  %v972 = vmul.f32 %v934, %v960
  %v973 = vpack.c.bf16 %v967, %v967
  %v974 = vpack.c.bf16 %v968, %v968
  %v975 = vpack.c.bf16 %v969, %v969
  %v976 = vpack.c.bf16 %v970, %v970
  %v977 = vpack.c.bf16 %v971, %v971
  %v978 = vpack.c.bf16 %v972, %v972
  %v985 = vcombine.low %v973, %v974
  %v986 = vcombine.low %v975, %v976
  %v988 = vunpack.c.l.s4 1983009808
  %v989 = vunpack.c.0.s8 %v988
  %v990 = vlaneseq
  %v991 = vshrl.u32 %v990, 7
  %v992 = vsub.s32 %v989, %v991
  %v993 = vrot.slane %v985, %v992
  %v995 = vunpack.c.l.s4 1983009808
  %v996 = vunpack.c.0.s8 %v995
  %v997 = vlaneseq
  %v998 = vshrl.u32 %v997, 7
  %v999 = vsub.s32 %v996, %v998
  %v1000 = vrot.slane %v986, %v999
  %v1001 = vcombine.low %v993, %v1000
  %v1002 = vcombine.low %v977, %v978
  %v1004 = vunpack.c.l.s4 1983009808
  %v1005 = vunpack.c.0.s8 %v1004
  %v1006 = vlaneseq
  %v1007 = vshrl.u32 %v1006, 7
  %v1008 = vsub.s32 %v1005, %v1007
  %v1009 = vrot.slane %v1002, %v1008
  %1012 = vst [vmem:[#allocation2 + $0x2] sm:$0xff] %v1001
  %vm1013 = vcmask 60418
  %vm1014 = vmor %vm1013, %vm25
  %1015 = vst.msk [vmem:[#allocation2 + $0xa] sm:$0xf] %vm1014, %v1009
  %v1016 = vld [vmem:[#allocation2] sm:$0xff]
  %v1017 = vld [vmem:[#allocation2 + $0x8] sm:$0xf]
  %v1020 = vcombine.high %v1016, %v1016
  %v1022 = vunpack.c.l.s4 1983009808
  %v1023 = vunpack.c.0.s8 %v1022
  %v1024 = vlaneseq
  %v1025 = vshrl.u32 %v1024, 7
  %v1026 = vsub.s32 %v1023, %v1025
  %v1027 = vrot.slane %v1016, %v1026
  %v1029 = vunpack.c.l.s4 1983009808
  %v1030 = vunpack.c.0.s8 %v1029
  %v1031 = vlaneseq
  %v1032 = vshrl.u32 %v1031, 7
  %v1033 = vsub.s32 %v1030, %v1032
  %v1034 = vrot.slane %v1020, %v1033
  %v1036 = vunpack.c.l.s4 1983009808
  %v1037 = vunpack.c.0.s8 %v1036
  %v1038 = vlaneseq
  %v1039 = vshrl.u32 %v1038, 7
  %v1040 = vsub.s32 %v1037, %v1039
  %v1041 = vrot.slane %v1017, %v1040
  %1042 = vrot.lane.b32.xlu0 %v1027, 19
  %v1043 = vpop.permute.xlu0 %1042
  %1044 = vrot.lane.b32.xlu0 %v1034, 19
  %v1045 = vpop.permute.xlu0 %1044
  %1046 = vrot.lane.b32.xlu0 %v1041, 19
  %v1047 = vpop.permute.xlu0 %1046
  %v1048 = vrot.slane %v1043, 4
  %v1049 = vrot.slane %v1045, 4
  %v1050 = vrot.slane %v1047, 4
  %v1051 = vsel %vm295, %v1048, %v1049
  %v1052 = vsel %vm297, %v1043, %v1051
  %v1053 = vsel %vm295, %v1049, %v1050
  %v1054 = vsel %vm297, %v1045, %v1053
  %v1055 = vsel %vm297, %v1047, %v1050
  %1059 = vst [vmem:[#allocation3] sm:$0x33] %v1052
  %1060 = vst [vmem:[#allocation3 + $0x8] sm:$0x33] %v1054
  %1061 = vst.msk [vmem:[#allocation3 + $0x10] sm:$0x33] %vm308, %v1055
  %v1062 = vld [vmem:[#allocation2] sm:$0xff]
  %v1063 = vld [vmem:[#allocation2 + $0x8] sm:$0xf]
  %v1066 = vcombine.low %v1062, %v1062
  %v1068 = vunpack.c.l.s4 1983009808
  %v1069 = vunpack.c.0.s8 %v1068
  %v1070 = vlaneseq
  %v1071 = vshrl.u32 %v1070, 7
  %v1072 = vsub.s32 %v1069, %v1071
  %v1073 = vrot.slane %v1066, %v1072
  %v1075 = vunpack.c.l.s4 1983009808
  %v1076 = vunpack.c.0.s8 %v1075
  %v1077 = vlaneseq
  %v1078 = vshrl.u32 %v1077, 7
  %v1079 = vsub.s32 %v1076, %v1078
  %v1080 = vrot.slane %v1062, %v1079
  %v1081 = vcombine.low %v1063, %v1063
  %v1083 = vunpack.c.l.s4 1983009808
  %v1084 = vunpack.c.0.s8 %v1083
  %v1085 = vlaneseq
  %v1086 = vshrl.u32 %v1085, 7
  %v1087 = vsub.s32 %v1084, %v1086
  %v1088 = vrot.slane %v1081, %v1087
  %1089 = vrot.lane.b32.xlu0 %v1073, 18
  %v1090 = vpop.permute.xlu0 %1089
  %1091 = vrot.lane.b32.xlu0 %v1080, 18
  %v1092 = vpop.permute.xlu0 %1091
  %1093 = vrot.lane.b32.xlu0 %v1088, 18
  %v1094 = vpop.permute.xlu0 %1093
  %v1095 = vrot.slane %v1090, 4
  %v1096 = vrot.slane %v1092, 4
  %v1097 = vrot.slane %v1094, 4
  %v1098 = vsel %vm295, %v1095, %v1096
  %v1099 = vsel %vm347, %v1090, %v1098
  %v1100 = vsel %vm295, %v1096, %v1097
  %v1101 = vsel %vm347, %v1092, %v1100
  %v1102 = vsel %vm347, %v1094, %v1097
  %1106 = vst [vmem:[#allocation3] sm:$0xcc] %v1099
  %1107 = vst [vmem:[#allocation3 + $0x8] sm:$0xcc] %v1101
  %1108 = vst.msk [vmem:[#allocation3 + $0x10] sm:$0xcc] %vm357, %v1102
  %v1109 = vld [vmem:[#allocation2] sm:$0xff]
  %v1110 = vld [vmem:[#allocation2 + $0x8] sm:$0xf]
  %v1113 = vcombine.high %v1109, %v1109
  %v1115 = vunpack.c.l.s4 1983009808
  %v1116 = vunpack.c.0.s8 %v1115
  %v1117 = vlaneseq
  %v1118 = vshrl.u32 %v1117, 7
  %v1119 = vsub.s32 %v1116, %v1118
  %v1120 = vrot.slane %v1109, %v1119
  %v1122 = vunpack.c.l.s4 1983009808
  %v1123 = vunpack.c.0.s8 %v1122
  %v1124 = vlaneseq
  %v1125 = vshrl.u32 %v1124, 7
  %v1126 = vsub.s32 %v1123, %v1125
  %v1127 = vrot.slane %v1113, %v1126
  %v1129 = vunpack.c.l.s4 1983009808
  %v1130 = vunpack.c.0.s8 %v1129
  %v1131 = vlaneseq
  %v1132 = vshrl.u32 %v1131, 7
  %v1133 = vsub.s32 %v1130, %v1132
  %v1134 = vrot.slane %v1110, %v1133
  %1135 = vrot.lane.b32.xlu0 %v1120, 17
  %v1136 = vpop.permute.xlu0 %1135
  %1137 = vrot.lane.b32.xlu0 %v1127, 17
  %v1138 = vpop.permute.xlu0 %1137
  %1139 = vrot.lane.b32.xlu0 %v1134, 17
  %v1140 = vpop.permute.xlu0 %1139
  %v1141 = vrot.slane %v1136, 4
  %v1142 = vrot.slane %v1138, 4
  %v1143 = vrot.slane %v1140, 4
  %v1144 = vsel %vm295, %v1141, %v1142
  %v1145 = vsel %vm395, %v1136, %v1144
  %v1146 = vsel %vm295, %v1142, %v1143
  %v1147 = vsel %vm395, %v1138, %v1146
  %v1148 = vsel %vm395, %v1140, %v1143
  %1152 = vst [vmem:[#allocation3 + $0x18] sm:$0x33] %v1145
  %1153 = vst [vmem:[#allocation3 + $0x20] sm:$0x33] %v1147
  %1154 = vst.msk [vmem:[#allocation3 + $0x28] sm:$0x33] %vm308, %v1148
  %v1155 = vld [vmem:[#allocation2] sm:$0xff]
  %v1156 = vld [vmem:[#allocation2 + $0x8] sm:$0x3f]
  %v1159 = vcombine.low %v1155, %v1155
  %v1161 = vunpack.c.l.s4 1983009808
  %v1162 = vunpack.c.0.s8 %v1161
  %v1163 = vlaneseq
  %v1164 = vshrl.u32 %v1163, 7
  %v1165 = vsub.s32 %v1162, %v1164
  %v1166 = vrot.slane %v1159, %v1165
  %v1168 = vunpack.c.l.s4 1983009808
  %v1169 = vunpack.c.0.s8 %v1168
  %v1170 = vlaneseq
  %v1171 = vshrl.u32 %v1170, 7
  %v1172 = vsub.s32 %v1169, %v1171
  %v1173 = vrot.slane %v1155, %v1172
  %v1174 = vcombine.low %v1156, %v1156
  %v1176 = vunpack.c.l.s4 1983009808
  %v1177 = vunpack.c.0.s8 %v1176
  %v1178 = vlaneseq
  %v1179 = vshrl.u32 %v1178, 7
  %v1180 = vsub.s32 %v1177, %v1179
  %v1181 = vrot.slane %v1174, %v1180
  %v1183 = vunpack.c.l.s4 1983009808
  %v1184 = vunpack.c.0.s8 %v1183
  %v1185 = vlaneseq
  %v1186 = vshrl.u32 %v1185, 7
  %v1187 = vsub.s32 %v1184, %v1186
  %v1188 = vrot.slane %v1156, %v1187
  %1189 = vrot.lane.b32.xlu0 %v1166, 1
  %v1190 = vpop.permute.xlu0 %1189
  %1191 = vrot.lane.b32.xlu0 %v1173, 1
  %v1192 = vpop.permute.xlu0 %1191
  %1193 = vrot.lane.b32.xlu0 %v1181, 1
  %v1194 = vpop.permute.xlu0 %1193
  %1195 = vrot.lane.b32.xlu0 %v1188, 1
  %v1196 = vpop.permute.xlu0 %1195
  %v1197 = vrot.slane %v1190, 4
  %v1198 = vrot.slane %v1192, 4
  %v1199 = vrot.slane %v1194, 4
  %v1200 = vrot.slane %v1196, 4
  %v1201 = vsel %vm295, %v1197, %v1198
  %v1202 = vsel %vm453, %v1190, %v1201
  %v1203 = vsel %vm295, %v1198, %v1199
  %v1204 = vsel %vm453, %v1192, %v1203
  %v1205 = vsel %vm295, %v1199, %v1200
  %v1206 = vsel %vm453, %v1194, %v1205
  %1210 = vst [vmem:[#allocation3 + $0x18] sm:$0xcc] %v1202
  %1211 = vst [vmem:[#allocation3 + $0x20] sm:$0xcc] %v1204
  %1212 = vst.msk [vmem:[#allocation3 + $0x28] sm:$0xcc] %vm357, %v1206
  %v1213 = vld [vmem:[#allocation2 + $0x2] sm:$0xff]
  %v1214 = vld [vmem:[#allocation2 + $0xa] sm:$0xf]
  %v1217 = vcombine.high %v1213, %v1213
  %v1219 = vunpack.c.l.s4 1983009808
  %v1220 = vunpack.c.0.s8 %v1219
  %v1221 = vlaneseq
  %v1222 = vshrl.u32 %v1221, 7
  %v1223 = vsub.s32 %v1220, %v1222
  %v1224 = vrot.slane %v1213, %v1223
  %v1226 = vunpack.c.l.s4 1983009808
  %v1227 = vunpack.c.0.s8 %v1226
  %v1228 = vlaneseq
  %v1229 = vshrl.u32 %v1228, 7
  %v1230 = vsub.s32 %v1227, %v1229
  %v1231 = vrot.slane %v1217, %v1230
  %v1233 = vunpack.c.l.s4 1983009808
  %v1234 = vunpack.c.0.s8 %v1233
  %v1235 = vlaneseq
  %v1236 = vshrl.u32 %v1235, 7
  %v1237 = vsub.s32 %v1234, %v1236
  %v1238 = vrot.slane %v1214, %v1237
  %1242 = vst [vmem:[#allocation3 + $0x30] sm:$0x33] %v1224
  %1243 = vst [vmem:[#allocation3 + $0x38] sm:$0x33] %v1231
  %1244 = vst.msk [vmem:[#allocation3 + $0x40] sm:$0x33] %vm308, %v1238
  %v1245 = vld [vmem:[#allocation2 + $0x2] sm:$0xff]
  %v1246 = vld [vmem:[#allocation2 + $0xa] sm:$0xf]
  %v1249 = vcombine.low %v1245, %v1245
  %v1251 = vunpack.c.l.s4 1983009808
  %v1252 = vunpack.c.0.s8 %v1251
  %v1253 = vlaneseq
  %v1254 = vshrl.u32 %v1253, 7
  %v1255 = vsub.s32 %v1252, %v1254
  %v1256 = vrot.slane %v1249, %v1255
  %v1258 = vunpack.c.l.s4 1983009808
  %v1259 = vunpack.c.0.s8 %v1258
  %v1260 = vlaneseq
  %v1261 = vshrl.u32 %v1260, 7
  %v1262 = vsub.s32 %v1259, %v1261
  %v1263 = vrot.slane %v1245, %v1262
  %v1264 = vcombine.low %v1246, %v1246
  %v1266 = vunpack.c.l.s4 1983009808
  %v1267 = vunpack.c.0.s8 %v1266
  %v1268 = vlaneseq
  %v1269 = vshrl.u32 %v1268, 7
  %v1270 = vsub.s32 %v1267, %v1269
  %v1271 = vrot.slane %v1264, %v1270
  %1272 = vrot.lane.b32.xlu0 %v1256, 127
  %v1273 = vpop.permute.xlu0 %1272
  %1274 = vrot.lane.b32.xlu0 %v1263, 127
  %v1275 = vpop.permute.xlu0 %1274
  %1276 = vrot.lane.b32.xlu0 %v1271, 127
  %v1277 = vpop.permute.xlu0 %1276
  %v1278 = vrot.slane %v1273, 4
  %v1279 = vrot.slane %v1275, 4
  %v1280 = vrot.slane %v1277, 4
  %v1281 = vsel %vm295, %v1278, %v1279
  %v1282 = vsel %vm534, %v1273, %v1281
  %v1283 = vsel %vm295, %v1279, %v1280
  %v1284 = vsel %vm534, %v1275, %v1283
  %v1285 = vsel %vm534, %v1277, %v1280
  %1289 = vst [vmem:[#allocation3 + $0x30] sm:$0xcc] %v1282
  %1290 = vst [vmem:[#allocation3 + $0x38] sm:$0xcc] %v1284
  %1291 = vst.msk [vmem:[#allocation3 + $0x40] sm:$0xcc] %vm357, %v1285
  %v1292 = vld [vmem:[#allocation2 + $0x2] sm:$0xff]
  %v1293 = vld [vmem:[#allocation2 + $0xa] sm:$0xf]
  %v1296 = vcombine.high %v1292, %v1292
  %v1298 = vunpack.c.l.s4 1983009808
  %v1299 = vunpack.c.0.s8 %v1298
  %v1300 = vlaneseq
  %v1301 = vshrl.u32 %v1300, 7
  %v1302 = vsub.s32 %v1299, %v1301
  %v1303 = vrot.slane %v1292, %v1302
  %v1305 = vunpack.c.l.s4 1983009808
  %v1306 = vunpack.c.0.s8 %v1305
  %v1307 = vlaneseq
  %v1308 = vshrl.u32 %v1307, 7
  %v1309 = vsub.s32 %v1306, %v1308
  %v1310 = vrot.slane %v1296, %v1309
  %v1312 = vunpack.c.l.s4 1983009808
  %v1313 = vunpack.c.0.s8 %v1312
  %v1314 = vlaneseq
  %v1315 = vshrl.u32 %v1314, 7
  %v1316 = vsub.s32 %v1313, %v1315
  %v1317 = vrot.slane %v1293, %v1316
  %1318 = vrot.lane.b32.xlu0 %v1303, 111
  %v1319 = vpop.permute.xlu0 %1318
  %1320 = vrot.lane.b32.xlu0 %v1310, 111
  %v1321 = vpop.permute.xlu0 %1320
  %1322 = vrot.lane.b32.xlu0 %v1317, 111
  %v1323 = vpop.permute.xlu0 %1322
  %v1324 = vrot.slane %v1319, 4
  %v1325 = vrot.slane %v1321, 4
  %v1326 = vrot.slane %v1323, 4
  %v1327 = vsel %vm295, %v1324, %v1325
  %v1328 = vsel %vm581, %v1319, %v1327
  %v1329 = vsel %vm295, %v1325, %v1326
  %v1330 = vsel %vm581, %v1321, %v1329
  %v1331 = vsel %vm581, %v1323, %v1326
  %1335 = vst [vmem:[#allocation3 + $0x48] sm:$0x33] %v1328
  %1336 = vst [vmem:[#allocation3 + $0x50] sm:$0x33] %v1330
  %1337 = vst.msk [vmem:[#allocation3 + $0x58] sm:$0x33] %vm308, %v1331
  %v1338 = vld [vmem:[#allocation2 + $0x2] sm:$0xff]
  %v1339 = vld [vmem:[#allocation2 + $0xa] sm:$0xf]
  %v1342 = vcombine.low %v1338, %v1338
  %v1344 = vunpack.c.l.s4 1983009808
  %v1345 = vunpack.c.0.s8 %v1344
  %v1346 = vlaneseq
  %v1347 = vshrl.u32 %v1346, 7
  %v1348 = vsub.s32 %v1345, %v1347
  %v1349 = vrot.slane %v1342, %v1348
  %v1351 = vunpack.c.l.s4 1983009808
  %v1352 = vunpack.c.0.s8 %v1351
  %v1353 = vlaneseq
  %v1354 = vshrl.u32 %v1353, 7
  %v1355 = vsub.s32 %v1352, %v1354
  %v1356 = vrot.slane %v1338, %v1355
  %v1357 = vcombine.low %v1339, %v1339
  %v1359 = vunpack.c.l.s4 1983009808
  %v1360 = vunpack.c.0.s8 %v1359
  %v1361 = vlaneseq
  %v1362 = vshrl.u32 %v1361, 7
  %v1363 = vsub.s32 %v1360, %v1362
  %v1364 = vrot.slane %v1357, %v1363
  %1365 = vrot.lane.b32.xlu0 %v1349, 110
  %v1366 = vpop.permute.xlu0 %1365
  %1367 = vrot.lane.b32.xlu0 %v1356, 110
  %v1368 = vpop.permute.xlu0 %1367
  %1369 = vrot.lane.b32.xlu0 %v1364, 110
  %v1370 = vpop.permute.xlu0 %1369
  %v1371 = vrot.slane %v1366, 4
  %v1372 = vrot.slane %v1368, 4
  %v1373 = vrot.slane %v1370, 4
  %v1374 = vsel %vm295, %v1371, %v1372
  %v1375 = vsel %vm629, %v1366, %v1374
  %v1376 = vsel %vm295, %v1372, %v1373
  %v1377 = vsel %vm629, %v1368, %v1376
  %v1378 = vsel %vm629, %v1370, %v1373
  %1382 = vst [vmem:[#allocation3 + $0x48] sm:$0xcc] %v1375
  %1383 = vst [vmem:[#allocation3 + $0x50] sm:$0xcc] %v1377
  %1384 = vst.msk [vmem:[#allocation3 + $0x58] sm:$0xcc] %vm357, %v1378
  %v1385 = vld [vmem:[#allocation2 + $0x2] sm:$0xff]
  %v1386 = vld [vmem:[#allocation2 + $0xa] sm:$0xf]
  %v1389 = vcombine.high %v1385, %v1385
  %v1391 = vunpack.c.l.s4 1983009808
  %v1392 = vunpack.c.0.s8 %v1391
  %v1393 = vlaneseq
  %v1394 = vshrl.u32 %v1393, 7
  %v1395 = vsub.s32 %v1392, %v1394
  %v1396 = vrot.slane %v1385, %v1395
  %v1398 = vunpack.c.l.s4 1983009808
  %v1399 = vunpack.c.0.s8 %v1398
  %v1400 = vlaneseq
  %v1401 = vshrl.u32 %v1400, 7
  %v1402 = vsub.s32 %v1399, %v1401
  %v1403 = vrot.slane %v1389, %v1402
  %v1405 = vunpack.c.l.s4 1983009808
  %v1406 = vunpack.c.0.s8 %v1405
  %v1407 = vlaneseq
  %v1408 = vshrl.u32 %v1407, 7
  %v1409 = vsub.s32 %v1406, %v1408
  %v1410 = vrot.slane %v1386, %v1409
  %1411 = vrot.lane.b32.xlu0 %v1396, 109
  %v1412 = vpop.permute.xlu0 %1411
  %1413 = vrot.lane.b32.xlu0 %v1403, 109
  %v1414 = vpop.permute.xlu0 %1413
  %1415 = vrot.lane.b32.xlu0 %v1410, 109
  %v1416 = vpop.permute.xlu0 %1415
  %v1417 = vrot.slane %v1412, 4
  %v1418 = vrot.slane %v1414, 4
  %v1419 = vrot.slane %v1416, 4
  %v1420 = vsel %vm295, %v1417, %v1418
  %v1421 = vsel %vm676, %v1412, %v1420
  %v1422 = vsel %vm295, %v1418, %v1419
  %v1423 = vsel %vm676, %v1414, %v1422
  %v1424 = vsel %vm676, %v1416, %v1419
  %1428 = vst [vmem:[#allocation3 + $0x60] sm:$0x33] %v1421
  %1429 = vst [vmem:[#allocation3 + $0x68] sm:$0x33] %v1423
  %1430 = vst.msk [vmem:[#allocation3 + $0x70] sm:$0x33] %vm308, %v1424
  %v1431 = vld [vmem:[%s3] sm:$0x3]
  %v1432 = vld [vmem:[#allocation3] sm:$0xff]
  %v1433 = vld [vmem:[#allocation3 + $0x8] sm:$0xff]
  %v1434 = vld [vmem:[#allocation3 + $0x10] sm:$0xff]
  %v1435 = vld [vmem:[#allocation3 + $0x18] sm:$0xff]
  %v1436 = vld [vmem:[#allocation3 + $0x20] sm:$0xff]
  %v1437 = vld [vmem:[#allocation3 + $0x28] sm:$0xff]
  %v1438 = vld [vmem:[#allocation3 + $0x30] sm:$0xff]
  %v1439 = vld [vmem:[#allocation3 + $0x38] sm:$0xff]
  %v1440 = vld [vmem:[#allocation3 + $0x40] sm:$0xff]
  %v1441 = vld [vmem:[#allocation3 + $0x48] sm:$0xff]
  %v1442 = vld [vmem:[#allocation3 + $0x50] sm:$0xff]
  %v1443 = vld [vmem:[#allocation3 + $0x58] sm:$0xff]
  %v1444 = vld [vmem:[#allocation3 + $0x60] sm:$0x33]
  %v1445 = vld [vmem:[#allocation3 + $0x68] sm:$0x33]
  %v1446 = vld [vmem:[#allocation3 + $0x70] sm:$0x33]
  %v1447 = vld [vmem:[%s4] sm:$0xf]
  %1449 = vset.pattern.permute.xlu0 0
  %1450 = vperm.xlu0 %1449, %v1447
  %v1451 = vpop.permute.xlu0 %1450
  %v1468 = vunpack.c.l.b16 %v1432
  %v1469 = vunpack.c.h.b16 %v1432
  %v1470 = vunpack.c.l.b16 %v1433
  %v1471 = vunpack.c.h.b16 %v1433
  %v1472 = vunpack.c.l.b16 %v1434
  %v1473 = vunpack.c.h.b16 %v1434
  %v1474 = vunpack.c.l.b16 %v1435
  %v1475 = vunpack.c.h.b16 %v1435
  %v1476 = vunpack.c.l.b16 %v1436
  %v1477 = vunpack.c.h.b16 %v1436
  %v1478 = vunpack.c.l.b16 %v1437
  %v1479 = vunpack.c.h.b16 %v1437
  %v1480 = vunpack.c.l.b16 %v1438
  %v1481 = vunpack.c.h.b16 %v1438
  %v1482 = vunpack.c.l.b16 %v1439
  %v1483 = vunpack.c.h.b16 %v1439
  %v1484 = vunpack.c.l.b16 %v1440
  %v1485 = vunpack.c.h.b16 %v1440
  %v1486 = vunpack.c.l.b16 %v1441
  %v1487 = vunpack.c.h.b16 %v1441
  %v1488 = vunpack.c.l.b16 %v1442
  %v1489 = vunpack.c.h.b16 %v1442
  %v1490 = vunpack.c.l.b16 %v1443
  %v1491 = vunpack.c.h.b16 %v1443
  %v1492 = vunpack.c.l.b16 %v1444
  %v1493 = vunpack.c.h.b16 %v1444
  %v1494 = vunpack.c.l.b16 %v1445
  %v1495 = vunpack.c.h.b16 %v1445
  %v1496 = vunpack.c.l.b16 %v1446
  %v1497 = vunpack.c.h.b16 %v1446
  %v1498 = vpack.c.b16 %v1474, %v1468
  %v1499 = vpack.c.b16 %v1475, %v1469
  %v1500 = vpack.c.b16 %v1476, %v1470
  %v1501 = vpack.c.b16 %v1477, %v1471
  %v1502 = vpack.c.b16 %v1478, %v1472
  %v1503 = vpack.c.b16 %v1479, %v1473
  %v1504 = vpack.c.b16 %v1486, %v1480
  %v1505 = vpack.c.b16 %v1487, %v1481
  %v1506 = vpack.c.b16 %v1488, %v1482
  %v1507 = vpack.c.b16 %v1489, %v1483
  %v1508 = vpack.c.b16 %v1490, %v1484
  %v1509 = vpack.c.b16 %v1491, %v1485
  %v1510 = vpack.c.b16 %v1492, %v1492
  %v1511 = vpack.c.b16 %v1493, %v1493
  %v1512 = vpack.c.b16 %v1494, %v1494
  %v1513 = vpack.c.b16 %v1495, %v1495
  %v1514 = vpack.c.b16 %v1496, %v1496
  %v1515 = vpack.c.b16 %v1497, %v1497
  %v1529 = vsel %vm784, %v1431, 0
  %v1532 = vsel %vm25, %v1510, 0
  %v1535 = vsel %vm25, %v1511, 0
  %v1538 = vsel %vm25, %v1512, 0
  %v1541 = vsel %vm25, %v1513, 0
  %v1544 = vsel %vm25, %v1514, 0
  %v1547 = vsel %vm25, %v1515, 0
  %1549 = vmatprep.subr.bf16.mxu0 %v1499
  %1550 = vmatpush1.bf16.msra.mxu0 %v1498
  %1551 = vmatprep.subr.bf16.mxu0 %v1505
  %1552 = vmatpush1.bf16.msra.mxu0 %v1504
  %1553 = vmatprep.subr.bf16.mxu0 %v1535
  %1554 = vmatpush1.bf16.msra.mxu0 %v1532
  %1555 = vmatprep.subr.bf16.mxu0 0
  %1556 = vmatpush1.bf16.msra.mxu0 0
  %1557 = vmatprep.subr.bf16.mxu0 0
  %1558 = vmatpush1.bf16.msra.mxu0 0
  %1559 = vmatprep.subr.bf16.mxu0 0
  %1560 = vmatpush1.bf16.msra.mxu0 0
  %1561 = vmatprep.subr.bf16.mxu0 0
  %1562 = vmatpush1.bf16.msra.mxu0 0
  %1563 = vmatprep.subr.bf16.mxu0 0
  %1564 = vmatpush1.bf16.msra.mxu0 0
  %1565 = vmatprep.subr.bf16.mxu0 0
  %1566 = vmatpush1.bf16.msra.mxu0 0
  %1567 = vmatprep.subr.bf16.mxu0 0
  %1568 = vmatpush1.bf16.msra.mxu0 0
  %1569 = vmatprep.subr.bf16.mxu0 0
  %1570 = vmatpush1.bf16.msra.mxu0 0
  %1571 = vmatprep.subr.bf16.mxu0 0
  %1572 = vmatpush1.bf16.msra.mxu0 0
  %1573 = vmatprep.subr.bf16.mxu0 0
  %1574 = vmatpush1.bf16.msra.mxu0 0
  %1575 = vmatprep.subr.bf16.mxu0 0
  %1576 = vmatpush1.bf16.msra.mxu0 0
  %1577 = vmatprep.subr.bf16.mxu0 0
  %1578 = vmatpush1.bf16.msra.mxu0 0
  %1579 = vmatprep.subr.bf16.mxu0 0
  %1580 = vmatpush1.bf16.msra.mxu0 0
  %1581 = vmatprep.mubr.bf16.mxu0 0
  %1582 = vmatmul.mubr.bf16.gmra.mrb[0].mxu0 %v1529
  %v1583 = vpop.f32.mrb[0].mxu0
  %v1584 = vadd.f32 %v1451, %v1583
  %v1585 = vpop.f32.mrb[0].mxu0
  %v1586 = vadd.f32 %v1451, %v1585
  %v1587 = vpop.f32.mrb[0].mxu0
  %v1588 = vpop.f32.mrb[0].mxu0
  %1589 = vdwg.mxu0
  %1590 = vmatprep.subr.bf16.mxu0 %v1501
  %1591 = vmatpush1.bf16.msra.mxu0 %v1500
  %1592 = vmatprep.subr.bf16.mxu0 %v1507
  %1593 = vmatpush1.bf16.msra.mxu0 %v1506
  %1594 = vmatprep.subr.bf16.mxu0 %v1541
  %1595 = vmatpush1.bf16.msra.mxu0 %v1538
  %1596 = vmatprep.subr.bf16.mxu0 0
  %1597 = vmatpush1.bf16.msra.mxu0 0
  %1598 = vmatprep.subr.bf16.mxu0 0
  %1599 = vmatpush1.bf16.msra.mxu0 0
  %1600 = vmatprep.subr.bf16.mxu0 0
  %1601 = vmatpush1.bf16.msra.mxu0 0
  %1602 = vmatprep.subr.bf16.mxu0 0
  %1603 = vmatpush1.bf16.msra.mxu0 0
  %1604 = vmatprep.subr.bf16.mxu0 0
  %1605 = vmatpush1.bf16.msra.mxu0 0
  %1606 = vmatprep.subr.bf16.mxu0 0
  %1607 = vmatpush1.bf16.msra.mxu0 0
  %1608 = vmatprep.subr.bf16.mxu0 0
  %1609 = vmatpush1.bf16.msra.mxu0 0
  %1610 = vmatprep.subr.bf16.mxu0 0
  %1611 = vmatpush1.bf16.msra.mxu0 0
  %1612 = vmatprep.subr.bf16.mxu0 0
  %1613 = vmatpush1.bf16.msra.mxu0 0
  %1614 = vmatprep.subr.bf16.mxu0 0
  %1615 = vmatpush1.bf16.msra.mxu0 0
  %1616 = vmatprep.subr.bf16.mxu0 0
  %1617 = vmatpush1.bf16.msra.mxu0 0
  %1618 = vmatprep.subr.bf16.mxu0 0
  %1619 = vmatpush1.bf16.msra.mxu0 0
  %1620 = vmatprep.subr.bf16.mxu0 0
  %1621 = vmatpush1.bf16.msra.mxu0 0
  %1622 = vmatprep.mubr.bf16.mxu0 0
  %1623 = vmatmul.mubr.bf16.gmra.mrb[0].mxu0 %v1529
  %v1624 = vpop.f32.mrb[0].mxu0
  %v1625 = vadd.f32 %v1451, %v1624
  %v1626 = vpop.f32.mrb[0].mxu0
  %v1627 = vadd.f32 %v1451, %v1626
  %v1628 = vpop.f32.mrb[0].mxu0
  %v1629 = vpop.f32.mrb[0].mxu0
  %1630 = vdwg.mxu0
  %1631 = vmatprep.subr.bf16.mxu0 %v1503
  %1632 = vmatpush1.bf16.msra.mxu0 %v1502
  %1633 = vmatprep.subr.bf16.mxu0 %v1509
  %1634 = vmatpush1.bf16.msra.mxu0 %v1508
  %1635 = vmatprep.subr.bf16.mxu0 %v1547
  %1636 = vmatpush1.bf16.msra.mxu0 %v1544
  %1637 = vmatprep.subr.bf16.mxu0 0
  %1638 = vmatpush1.bf16.msra.mxu0 0
  %1639 = vmatprep.subr.bf16.mxu0 0
  %1640 = vmatpush1.bf16.msra.mxu0 0
  %1641 = vmatprep.subr.bf16.mxu0 0
  %1642 = vmatpush1.bf16.msra.mxu0 0
  %1643 = vmatprep.subr.bf16.mxu0 0
  %1644 = vmatpush1.bf16.msra.mxu0 0
  %1645 = vmatprep.subr.bf16.mxu0 0
  %1646 = vmatpush1.bf16.msra.mxu0 0
  %1647 = vmatprep.subr.bf16.mxu0 0
  %1648 = vmatpush1.bf16.msra.mxu0 0
  %1649 = vmatprep.subr.bf16.mxu0 0
  %1650 = vmatpush1.bf16.msra.mxu0 0
  %1651 = vmatprep.subr.bf16.mxu0 0
  %1652 = vmatpush1.bf16.msra.mxu0 0
  %1653 = vmatprep.subr.bf16.mxu0 0
  %1654 = vmatpush1.bf16.msra.mxu0 0
  %1655 = vmatprep.subr.bf16.mxu0 0
  %1656 = vmatpush1.bf16.msra.mxu0 0
  %1657 = vmatprep.subr.bf16.mxu0 0
  %1658 = vmatpush1.bf16.msra.mxu0 0
  %1659 = vmatprep.subr.bf16.mxu0 0
  %1660 = vmatpush1.bf16.msra.mxu0 0
  %1661 = vmatprep.subr.bf16.mxu0 0
  %1662 = vmatpush1.bf16.msra.mxu0 0
  %1663 = vmatprep.mubr.bf16.mxu0 0
  %1664 = vmatmul.mubr.bf16.gmra.mrb[0].mxu0 %v1529
  %v1665 = vpop.f32.mrb[0].mxu0
  %v1666 = vadd.f32 %v1451, %v1665
  %v1667 = vpop.f32.mrb[0].mxu0
  %v1668 = vpop.f32.mrb[0].mxu0
  %v1669 = vpop.f32.mrb[0].mxu0
  %1670 = vdwg.mxu0
  %v1671 = vld [vmem:[%s0] sm:$0xff]
  %1673 = vrot.lane.b32.xlu0 %v1671, 19
  %v1674 = vpop.permute.xlu0 %1673
  %v1676 = vadd.f32 %v1584, %v1674
  %1678 = vrot.lane.b32.xlu0 %v1676, 109
  %v1679 = vpop.permute.xlu0 %1678
  %vm1681 = vcmask 125952
  %1682 = vst.msk [vmem:[%s6] sm:$0xf] %vm1681, %v1679
  %1683 = vrot.lane.b32.xlu0 %v1671, 21
  %v1684 = vpop.permute.xlu0 %1683
  %v1686 = vadd.f32 %v1584, %v1684
  %1688 = vrot.lane.b32.xlu0 %v1686, 107
  %v1689 = vpop.permute.xlu0 %1688
  %vm1691 = vcmask 257152
  %1692 = vst.msk [vmem:[%s6] sm:$0xf] %vm1691, %v1689
  %1693 = vrot.lane.b32.xlu0 %v1671, 23
  %v1694 = vpop.permute.xlu0 %1693
  %v1696 = vadd.f32 %v1584, %v1694
  %1698 = vrot.lane.b32.xlu0 %v1696, 105
  %v1699 = vpop.permute.xlu0 %1698
  %vm1701 = vcmask 388352
  %1702 = vst.msk [vmem:[%s6] sm:$0xf] %vm1701, %v1699
  %1703 = vrot.lane.b32.xlu0 %v1671, 25
  %v1704 = vpop.permute.xlu0 %1703
  %v1706 = vadd.f32 %v1584, %v1704
  %1708 = vrot.lane.b32.xlu0 %v1706, 103
  %v1709 = vpop.permute.xlu0 %1708
  %vm1711 = vcmask 519552
  %1712 = vst.msk [vmem:[%s6] sm:$0xf] %vm1711, %v1709
  %1713 = vrot.lane.b32.xlu0 %v1671, 27
  %v1714 = vpop.permute.xlu0 %1713
  %v1716 = vadd.f32 %v1584, %v1714
  %1718 = vrot.lane.b32.xlu0 %v1716, 101
  %v1719 = vpop.permute.xlu0 %1718
  %vm1721 = vcmask 650752
  %1722 = vst.msk [vmem:[%s6] sm:$0xf] %vm1721, %v1719
  %1723 = vrot.lane.b32.xlu0 %v1671, 29
  %v1724 = vpop.permute.xlu0 %1723
  %v1726 = vadd.f32 %v1584, %v1724
  %1728 = vrot.lane.b32.xlu0 %v1726, 99
  %v1729 = vpop.permute.xlu0 %1728
  %vm1731 = vcmask 781952
  %1732 = vst.msk [vmem:[%s6] sm:$0xf] %vm1731, %v1729
  %1733 = vrot.lane.b32.xlu0 %v1671, 31
  %v1734 = vpop.permute.xlu0 %1733
  %v1736 = vadd.f32 %v1584, %v1734
  %v1737 = vadd.f32 %v1586, %v1734
  %v1740 = vcombine.low %v1736, %v1737
  %1741 = vrot.lane.b32.xlu0 %v1740, 97
  %v1742 = vpop.permute.xlu0 %1741
  %v1743 = vrot.slane %v1742, 4
  %vm1744 = vcmask 793600
  %v1745 = vsel %vm1744, %v1742, %v1743
  %vm1747 = vcmask 913152
  %1748 = vst.msk [vmem:[%s6] sm:$0xf] %vm1747, %v1745
  %1749 = vrot.lane.b32.xlu0 %v1671, 33
  %v1750 = vpop.permute.xlu0 %1749
  %v1752 = vadd.f32 %v1586, %v1750
  %1754 = vrot.lane.b32.xlu0 %v1752, 95
  %v1755 = vpop.permute.xlu0 %1754
  %vm1757 = vcmask 1044352
  %1758 = vst.msk [vmem:[%s6] sm:$0xf] %vm1757, %v1755
  %v1759 = vcombine.high %v1671, %v1671
  %1760 = vrot.lane.b32.xlu0 %v1759, 35
  %v1761 = vpop.permute.xlu0 %1760
  %v1763 = vadd.f32 %v1586, %v1761
  %1765 = vrot.lane.b32.xlu0 %v1763, 93
  %v1766 = vpop.permute.xlu0 %1765
  %1768 = vst.msk [vmem:[%s6 + $0x4] sm:$0xf] %vm1681, %v1766
  %1769 = vrot.lane.b32.xlu0 %v1759, 37
  %v1770 = vpop.permute.xlu0 %1769
  %v1772 = vadd.f32 %v1586, %v1770
  %1774 = vrot.lane.b32.xlu0 %v1772, 91
  %v1775 = vpop.permute.xlu0 %1774
  %1777 = vst.msk [vmem:[%s6 + $0x4] sm:$0xf] %vm1691, %v1775
  %1778 = vrot.lane.b32.xlu0 %v1759, 39
  %v1779 = vpop.permute.xlu0 %1778
  %v1781 = vadd.f32 %v1586, %v1779
  %1783 = vrot.lane.b32.xlu0 %v1781, 89
  %v1784 = vpop.permute.xlu0 %1783
  %1786 = vst.msk [vmem:[%s6 + $0x4] sm:$0xf] %vm1701, %v1784
  %1787 = vrot.lane.b32.xlu0 %v1759, 41
  %v1788 = vpop.permute.xlu0 %1787
  %v1790 = vadd.f32 %v1586, %v1788
  %1792 = vrot.lane.b32.xlu0 %v1790, 87
  %v1793 = vpop.permute.xlu0 %1792
  %1795 = vst.msk [vmem:[%s6 + $0x4] sm:$0xf] %vm1711, %v1793
  %1796 = vrot.lane.b32.xlu0 %v1759, 43
  %v1797 = vpop.permute.xlu0 %1796
  %v1799 = vadd.f32 %v1586, %v1797
  %1801 = vrot.lane.b32.xlu0 %v1799, 85
  %v1802 = vpop.permute.xlu0 %1801
  %1804 = vst.msk [vmem:[%s6 + $0x4] sm:$0xf] %vm1721, %v1802
  %1805 = vrot.lane.b32.xlu0 %v1759, 45
  %v1806 = vpop.permute.xlu0 %1805
  %v1808 = vadd.f32 %v1586, %v1806
  %v1809 = vadd.f32 %v1625, %v1806
  %v1812 = vcombine.low %v1808, %v1809
  %1813 = vrot.lane.b32.xlu0 %v1812, 83
  %v1814 = vpop.permute.xlu0 %1813
  %v1815 = vrot.slane %v1814, 4
  %vm1816 = vcmask 678912
  %v1817 = vsel %vm1816, %v1814, %v1815
  %1819 = vst.msk [vmem:[%s6 + $0x4] sm:$0xf] %vm1731, %v1817
  %1820 = vrot.lane.b32.xlu0 %v1759, 47
  %v1821 = vpop.permute.xlu0 %1820
  %v1823 = vadd.f32 %v1625, %v1821
  %1825 = vrot.lane.b32.xlu0 %v1823, 81
  %v1826 = vpop.permute.xlu0 %1825
  %1828 = vst.msk [vmem:[%s6 + $0x4] sm:$0xf] %vm1747, %v1826
  %1829 = vrot.lane.b32.xlu0 %v1759, 49
  %v1830 = vpop.permute.xlu0 %1829
  %v1832 = vadd.f32 %v1625, %v1830
  %1834 = vrot.lane.b32.xlu0 %v1832, 79
  %v1835 = vpop.permute.xlu0 %1834
  %1837 = vst.msk [vmem:[%s6 + $0x4] sm:$0xf] %vm1757, %v1835
  %v1838 = vld [vmem:[%s146] sm:$0xff]
  %1840 = vrot.lane.b32.xlu0 %v1838, 87
  %v1841 = vpop.permute.xlu0 %1840
  %v1843 = vadd.f32 %v1625, %v1841
  %1845 = vrot.lane.b32.xlu0 %v1843, 41
  %v1846 = vpop.permute.xlu0 %1845
  %s1848 = scalar_lea.vmem %s6, 8
  %1849 = vst.msk [vmem:[%s1848] sm:$0xf] %vm1681, %v1846
  %1850 = vrot.lane.b32.xlu0 %v1838, 89
  %v1851 = vpop.permute.xlu0 %1850
  %v1853 = vadd.f32 %v1625, %v1851
  %1855 = vrot.lane.b32.xlu0 %v1853, 39
  %v1856 = vpop.permute.xlu0 %1855
  %1858 = vst.msk [vmem:[%s1848] sm:$0xf] %vm1691, %v1856
  %1859 = vrot.lane.b32.xlu0 %v1838, 91
  %v1860 = vpop.permute.xlu0 %1859
  %v1862 = vadd.f32 %v1625, %v1860
  %v1863 = vadd.f32 %v1627, %v1860
  %v1866 = vcombine.low %v1862, %v1863
  %1867 = vrot.lane.b32.xlu0 %v1866, 37
  %v1868 = vpop.permute.xlu0 %1867
  %v1869 = vrot.slane %v1868, 4
  %vm1870 = vcmask 302080
  %v1871 = vsel %vm1870, %v1868, %v1869
  %1873 = vst.msk [vmem:[%s1848] sm:$0xf] %vm1701, %v1871
  %1874 = vrot.lane.b32.xlu0 %v1838, 93
  %v1875 = vpop.permute.xlu0 %1874
  %v1877 = vadd.f32 %v1627, %v1875
  %1879 = vrot.lane.b32.xlu0 %v1877, 35
  %v1880 = vpop.permute.xlu0 %1879
  %1882 = vst.msk [vmem:[%s1848] sm:$0xf] %vm1711, %v1880
  %1883 = vrot.lane.b32.xlu0 %v1838, 95
  %v1884 = vpop.permute.xlu0 %1883
  %v1886 = vadd.f32 %v1627, %v1884
  %1888 = vrot.lane.b32.xlu0 %v1886, 33
  %v1889 = vpop.permute.xlu0 %1888
  %1891 = vst.msk [vmem:[%s1848] sm:$0xf] %vm1721, %v1889
  %1892 = vrot.lane.b32.xlu0 %v1838, 97
  %v1893 = vpop.permute.xlu0 %1892
  %v1895 = vadd.f32 %v1627, %v1893
  %1897 = vrot.lane.b32.xlu0 %v1895, 31
  %v1898 = vpop.permute.xlu0 %1897
  %1900 = vst.msk [vmem:[%s1848] sm:$0xf] %vm1731, %v1898
  %1901 = vrot.lane.b32.xlu0 %v1838, 99
  %v1902 = vpop.permute.xlu0 %1901
  %v1904 = vadd.f32 %v1627, %v1902
  %1906 = vrot.lane.b32.xlu0 %v1904, 29
  %v1907 = vpop.permute.xlu0 %1906
  %1909 = vst.msk [vmem:[%s1848] sm:$0xf] %vm1747, %v1907
  %1910 = vrot.lane.b32.xlu0 %v1838, 101
  %v1911 = vpop.permute.xlu0 %1910
  %v1913 = vadd.f32 %v1627, %v1911
  %1915 = vrot.lane.b32.xlu0 %v1913, 27
  %v1916 = vpop.permute.xlu0 %1915
  %1918 = vst.msk [vmem:[%s1848] sm:$0xf] %vm1757, %v1916
  %v1919 = vcombine.high %v1838, %v1838
  %1920 = vrot.lane.b32.xlu0 %v1919, 103
  %v1921 = vpop.permute.xlu0 %1920
  %v1923 = vadd.f32 %v1627, %v1921
  %1925 = vrot.lane.b32.xlu0 %v1923, 25
  %v1926 = vpop.permute.xlu0 %1925
  %1928 = vst.msk [vmem:[%s1848 + $0x4] sm:$0xf] %vm1681, %v1926
  %1929 = vrot.lane.b32.xlu0 %v1919, 105
  %v1930 = vpop.permute.xlu0 %1929
  %v1932 = vadd.f32 %v1627, %v1930
  %v1933 = vadd.f32 %v1666, %v1930
  %v1936 = vcombine.low %v1932, %v1933
  %1937 = vrot.lane.b32.xlu0 %v1936, 23
  %v1938 = vpop.permute.xlu0 %1937
  %v1939 = vrot.slane %v1938, 4
  %vm1940 = vcmask 187392
  %v1941 = vsel %vm1940, %v1938, %v1939
  %1943 = vst.msk [vmem:[%s1848 + $0x4] sm:$0xf] %vm1691, %v1941
  %1944 = vrot.lane.b32.xlu0 %v1919, 107
  %v1945 = vpop.permute.xlu0 %1944
  %v1947 = vadd.f32 %v1666, %v1945
  %1949 = vrot.lane.b32.xlu0 %v1947, 21
  %v1950 = vpop.permute.xlu0 %1949
  %1952 = vst.msk [vmem:[%s1848 + $0x4] sm:$0xf] %vm1701, %v1950
  %1953 = vrot.lane.b32.xlu0 %v1919, 109
  %v1954 = vpop.permute.xlu0 %1953
  %v1956 = vadd.f32 %v1666, %v1954
  %1958 = vrot.lane.b32.xlu0 %v1956, 19
  %v1959 = vpop.permute.xlu0 %1958
  %1961 = vst.msk [vmem:[%s1848 + $0x4] sm:$0xf] %vm1711, %v1959
  %1962 = vrot.lane.b32.xlu0 %v1919, 111
  %v1963 = vpop.permute.xlu0 %1962
  %v1965 = vadd.f32 %v1666, %v1963
  %1967 = vrot.lane.b32.xlu0 %v1965, 17
  %v1968 = vpop.permute.xlu0 %1967
  %1970 = vst.msk [vmem:[%s1848 + $0x4] sm:$0xf] %vm1721, %v1968
  %1971 = vrot.lane.b32.xlu0 %v1919, 113
  %v1972 = vpop.permute.xlu0 %1971
  %v1974 = vadd.f32 %v1666, %v1972
  %1976 = vrot.lane.b32.xlu0 %v1974, 15
  %v1977 = vpop.permute.xlu0 %1976
  %1979 = vst.msk [vmem:[%s1848 + $0x4] sm:$0xf] %vm1731, %v1977
  %1980 = vrot.lane.b32.xlu0 %v1919, 115
  %v1981 = vpop.permute.xlu0 %1980
  %v1983 = vadd.f32 %v1666, %v1981
  %1985 = vrot.lane.b32.xlu0 %v1983, 13
  %v1986 = vpop.permute.xlu0 %1985
  %1988 = vst.msk [vmem:[%s1848 + $0x4] sm:$0xf] %vm1747, %v1986
  %1989 = vrot.lane.b32.xlu0 %v1919, 117
  %v1990 = vpop.permute.xlu0 %1989
  %v1992 = vadd.f32 %v1666, %v1990
  %1994 = vrot.lane.b32.xlu0 %v1992, 11
  %v1995 = vpop.permute.xlu0 %1994
  %1997 = vst.msk [vmem:[%s1848 + $0x4] sm:$0xf] %vm1757, %v1995
  // Predicated region
  $region26: #{residual_block.1} parent=0 // pred_check
    _
  $region27: #{residual_block.1} parent=0 // pred_check_branch
    %1999 = sbr.rel (0) target = $region29
  $region28: #{residual_block.1} parent=0 // pred_region
    _
  $region29: #{residual_block.1} parent=0 // pred_fallthru
    _
  // Predicated region
  $region30: #{residual_block.1} parent=0 // pred_check
    _
  $region31: #{residual_block.1} parent=0 // pred_check_branch
    %2001 = sbr.rel (0) target = $region33
  $region32: #{residual_block.1} parent=0 // pred_region
    _
  $region33: #{residual_block.1} parent=0 // pred_fallthru
    _

</llo_original>
